<compile_context>
chip_gen: v6e
topology: v6e:2x2x1
jax: 0.10.0
libtpu: 0.0.40
codegen_flags: <defaults>
</compile_context>

<pallas_src>
import jax
import jax.numpy as jnp
from jax.experimental import pallas as pl
from jax.experimental.pallas import tpu as pltpu

DIM = 8  # const.dimension

# (in_features, out_features) per fc layer.
LAYER_SIZES = [
    (3 * DIM * DIM, 4 * DIM * DIM),   # fc1: 192 -> 256
    (4 * DIM * DIM, 8 * DIM * DIM),   # fc2: 256 -> 512
    (8 * DIM * DIM, 64 * DIM),        # fc3: 512 -> 512
    (64 * DIM, 32 * DIM),             # fc4: 512 -> 256
    (32 * DIM, 16 * DIM),             # fc5: 256 -> 128
    (16 * DIM, 4 * DIM),              # fc6: 128 -> 32
    (4 * DIM, 1 * DIM),               # fc7: 32  -> 8
]

IN_DIM = LAYER_SIZES[0][0]    # 192
OUT_DIM = LAYER_SIZES[-1][1]  # 8
OUT_PAD = 128                 # lane-dense fc7 output; sliced back in wrapper
MAX_TILE_B = 1024             # tall tiles, but bounded VMEM footprint


def _cdiv(a, b):
    return -(-a // b)


def _round_up(n, m):
    return _cdiv(n, m) * m


def _choose_tiling(batch):
    """Pick (tile_b, padded_batch).

    - >=2 tiles whenever batch >= 16 so the 'parallel' batch axis can be
      sharded across both TensorCores on v7x (no-op on v5e/v6e).
    - tile_b sized from the batch (sublane-aligned) to avoid padded-row work.
    - tiles capped at MAX_TILE_B rows to bound VMEM for huge batches.
    """
    if batch < 16:
        n_tiles = 1
    else:
        n_tiles = max(2, _cdiv(batch, MAX_TILE_B))
    tile_b = _round_up(_cdiv(batch, n_tiles), 8)
    return tile_b, n_tiles * tile_b


def mlp_kernel(x_ref,
               w1, b1, w2, b2, w3, b3, w4, b4, w5, b5, w6, b6, w7, b7,
               o_ref):
    """One batch tile through all 7 layers; weights are VMEM-resident."""
    # f32 tile DMA'd from HBM; cast to bf16 on the VPU (free under MXU slack).
    h = x_ref[...].astype(jnp.bfloat16)                  # (TILE_B, 192) bf16
    for w, b in ((w1, b1), (w2, b2), (w3, b3), (w4, b4), (w5, b5), (w6, b6)):
        # bf16 MXU inputs, f32 accumulation, f32 bias add.
        z = jnp.dot(h, w[...], preferred_element_type=jnp.float32) + b[...]
        # sigmoid on bf16 activations (EUP) -> next MXU push stays bf16.
        h = jax.nn.sigmoid(z.astype(jnp.bfloat16))
    # fc7: no activation; padded to 128 lanes -> unmasked, lane-dense store.
    o_ref[...] = jnp.dot(h, w7[...], preferred_element_type=jnp.float32) + b7[...]


def _const_spec(shape):
    # Whole array as a single block; constant index_map => fetched once and
    # kept resident across all batch tiles.
    return pl.BlockSpec(shape, lambda i: (0,) * len(shape))


@jax.jit
def mlp_forward(x_nchw, kparams):
    """x_nchw: (B, 3, D, D) float32. kparams from prepare_params().

    Returns (B, 1, D, 1) like the PyTorch view."""
    B = x_nchw.shape[0]
    x_flat = x_nchw.reshape(B, -1)          # nn.Flatten; stays f32 (cast in-kernel)

    tile_b, b_pad = _choose_tiling(B)
    if b_pad != B:
        x_flat = jnp.pad(x_flat, ((0, b_pad - B), (0, 0)))

    flat_params = []
    in_specs = [pl.BlockSpec((tile_b, IN_DIM), lambda i: (i, 0))]
    for (w, b) in kparams:
        flat_params += [w, b]
        in_specs += [_const_spec(w.shape), _const_spec(b.shape)]

    out = pl.pallas_call(
        mlp_kernel,
        out_shape=jax.ShapeDtypeStruct((b_pad, OUT_PAD), jnp.float32),
        grid=(b_pad // tile_b,),
        in_specs=in_specs,
        out_specs=pl.BlockSpec((tile_b, OUT_PAD), lambda i: (i, 0)),
        compiler_params=pltpu.CompilerParams(
            dimension_semantics=("parallel",),   # shard batch tiles across TCs
            vmem_limit_bytes=32 << 20,
        ),
    )(x_flat, *flat_params)

    # Drop batch padding and fake output lanes, then x.view(-1, 1, D, 1).
    return out[:B, :OUT_DIM].reshape(-1, 1, DIM, 1)


def init_params(key):
    """Deterministic init mimicking PyTorch Linear default (U[-1/sqrt(in), 1/sqrt(in)])."""
    params = []
    for (fan_in, fan_out) in LAYER_SIZES:
        key, kw, kb = jax.random.split(key, 3)
        bound = 1.0 / (fan_in ** 0.5)
        # stored as (in, out): kernel does h @ W + b
        w = jax.random.uniform(kw, (fan_in, fan_out), jnp.float32, -bound, bound)
        b = jax.random.uniform(kb, (1, fan_out), jnp.float32, -bound, bound)
        params.append((w, b))
    return params


def prepare_params(params):
    """One-time conversion to kernel format (do OUTSIDE the jitted forward):
    bf16 weights, f32 biases, fc7 zero-padded to OUT_PAD output lanes."""
    kparams = []
    last = len(params) - 1
    for i, (w, b) in enumerate(params):
        w = w.astype(jnp.bfloat16)
        b = b.astype(jnp.float32)
        if i == last:
            w = jnp.pad(w, ((0, 0), (0, OUT_PAD - w.shape[1])))
            b = jnp.pad(b, ((0, 0), (0, OUT_PAD - b.shape[1])))
        kparams.append((w, b))
    return kparams


def mlp_reference(x_nchw, params, kernel_numerics):
    """Pure-JAX reference. kernel_numerics=True mirrors the kernel's dtypes."""
    h = x_nchw.reshape(x_nchw.shape[0], -1)
    if kernel_numerics:
        h = h.astype(jnp.bfloat16)
    for i, (w, b) in enumerate(params):
        if kernel_numerics:
            z = jnp.dot(h, w.astype(jnp.bfloat16),
                        preferred_element_type=jnp.float32) + b
        else:
            z = h @ w + b
        if i < len(params) - 1:
            h = jax.nn.sigmoid(z.astype(jnp.bfloat16)) if kernel_numerics else jax.nn.sigmoid(z)
        else:
            h = z
    return h.astype(jnp.float32).reshape(-1, 1, DIM, 1)


if __name__ == "__main__":
    params = init_params(jax.random.PRNGKey(0))
    kparams = prepare_params(params)

    key = jax.random.PRNGKey(0)

    # Small batch (single 8-row tile, padded 2 -> 8 rows).
    key, kx = jax.random.split(key)
    B = 2
    x = jax.random.normal(kx, (B, 3, DIM, DIM), jnp.float32)

    out = jax.block_until_ready(mlp_forward(x, kparams))
    assert out.shape == (B, 1, DIM, 1), out.shape

    ref_bf16 = mlp_reference(x, params, kernel_numerics=True)   # same numerics as kernel
    ref_f32 = mlp_reference(x, params, kernel_numerics=False)   # full-f32 math
    assert jnp.allclose(out, ref_bf16, atol=1e-2, rtol=1e-2), "mismatch vs bf16 reference"
    assert jnp.allclose(out, ref_f32, atol=6e-2, rtol=6e-2), "mismatch vs f32 reference"

    # Larger batch exercising the multi-tile path (300 -> 2 tiles of 152 rows).
    key, kx2 = jax.random.split(key)
    B2 = 300
    x2 = jax.random.normal(kx2, (B2, 3, DIM, DIM), jnp.float32)
    out2 = jax.block_until_ready(mlp_forward(x2, kparams))
    assert out2.shape == (B2, 1, DIM, 1), out2.shape
    ref2 = mlp_reference(x2, params, kernel_numerics=True)
    assert jnp.allclose(out2, ref2, atol=1e-2, rtol=1e-2), "mismatch vs reference (batched)"

    print("KERNEL_OK")
</pallas_src>

<mosaic_0001>
module attributes {stable_mosaic.version = 11 : i64} {
  func.func @mlp_kernel(%arg0: i32, %arg1: memref<8x192xf32, #tpu.memory_space<vmem>>, %arg2: memref<192x256xbf16, #tpu.memory_space<vmem>>, %arg3: memref<1x256xf32, #tpu.memory_space<vmem>>, %arg4: memref<256x512xbf16, #tpu.memory_space<vmem>>, %arg5: memref<1x512xf32, #tpu.memory_space<vmem>>, %arg6: memref<512x512xbf16, #tpu.memory_space<vmem>>, %arg7: memref<1x512xf32, #tpu.memory_space<vmem>>, %arg8: memref<512x256xbf16, #tpu.memory_space<vmem>>, %arg9: memref<1x256xf32, #tpu.memory_space<vmem>>, %arg10: memref<256x128xbf16, #tpu.memory_space<vmem>>, %arg11: memref<1x128xf32, #tpu.memory_space<vmem>>, %arg12: memref<128x32xbf16, #tpu.memory_space<vmem>>, %arg13: memref<1x32xf32, #tpu.memory_space<vmem>>, %arg14: memref<32x128xbf16, #tpu.memory_space<vmem>>, %arg15: memref<1x128xf32, #tpu.memory_space<vmem>>, %arg16: memref<8x128xf32, #tpu.memory_space<vmem>>) attributes {dimension_semantics = [#tpu.dimension_semantics<parallel>], iteration_bounds = array<i64: 1>, scalar_prefetch = 0 : i64, scratch_operands = 0 : i64, tpu.core_type = #tpu.core_type<tc>, window_params = [{transform_indices = @transform_0, window_bounds = array<i64: 8, 192>}, {pipeline_mode = #tpu.pipeline_mode<synchronous>, transform_indices = @transform_1, window_bounds = array<i64: 192, 256>}, {pipeline_mode = #tpu.pipeline_mode<synchronous>, transform_indices = @transform_2, window_bounds = array<i64: 1, 256>}, {pipeline_mode = #tpu.pipeline_mode<synchronous>, transform_indices = @transform_3, window_bounds = array<i64: 256, 512>}, {pipeline_mode = #tpu.pipeline_mode<synchronous>, transform_indices = @transform_4, window_bounds = array<i64: 1, 512>}, {pipeline_mode = #tpu.pipeline_mode<synchronous>, transform_indices = @transform_5, window_bounds = array<i64: 512, 512>}, {pipeline_mode = #tpu.pipeline_mode<synchronous>, transform_indices = @transform_6, window_bounds = array<i64: 1, 512>}, {pipeline_mode = #tpu.pipeline_mode<synchronous>, transform_indices = @transform_7, window_bounds = array<i64: 512, 256>}, {pipeline_mode = #tpu.pipeline_mode<synchronous>, transform_indices = @transform_8, window_bounds = array<i64: 1, 256>}, {pipeline_mode = #tpu.pipeline_mode<synchronous>, transform_indices = @transform_9, window_bounds = array<i64: 256, 128>}, {pipeline_mode = #tpu.pipeline_mode<synchronous>, transform_indices = @transform_10, window_bounds = array<i64: 1, 128>}, {pipeline_mode = #tpu.pipeline_mode<synchronous>, transform_indices = @transform_11, window_bounds = array<i64: 128, 32>}, {pipeline_mode = #tpu.pipeline_mode<synchronous>, transform_indices = @transform_12, window_bounds = array<i64: 1, 32>}, {pipeline_mode = #tpu.pipeline_mode<synchronous>, transform_indices = @transform_13, window_bounds = array<i64: 32, 128>}, {pipeline_mode = #tpu.pipeline_mode<synchronous>, transform_indices = @transform_14, window_bounds = array<i64: 1, 128>}, {transform_indices = @transform_15, window_bounds = array<i64: 8, 128>}]} {
    %c0 = arith.constant 0 : index
    %c0_0 = arith.constant 0 : index
    %0 = vector.load %arg1[%c0, %c0_0] : memref<8x192xf32, #tpu.memory_space<vmem>>, vector<8x192xf32>
    %1 = arith.truncf %0 : vector<8x192xf32> to vector<8x192xbf16>
    %c0_1 = arith.constant 0 : index
    %c0_2 = arith.constant 0 : index
    %2 = vector.load %arg2[%c0_1, %c0_2] : memref<192x256xbf16, #tpu.memory_space<vmem>>, vector<192x256xbf16>
    %cst = arith.constant dense<0.000000e+00> : vector<8x256xf32>
    %3 = tpu.matmul %1, %2, %cst {dimension_numbers = #tpu.dot_dimension_numbers<[1], [0], [0], [1], [0, 0, 1, 1], [], []>} : vector<8x192xbf16>, vector<192x256xbf16>, vector<8x256xf32> -> vector<8x256xf32>
    %c0_3 = arith.constant 0 : index
    %c0_4 = arith.constant 0 : index
    %4 = vector.load %arg3[%c0_3, %c0_4] : memref<1x256xf32, #tpu.memory_space<vmem>>, vector<1x256xf32>
    %5 = vector.broadcast %4 : vector<1x256xf32> to vector<8x256xf32>
    %6 = arith.addf %3, %5 : vector<8x256xf32>
    %7 = arith.truncf %6 : vector<8x256xf32> to vector<8x256xbf16>
    %8 = arith.negf %7 : vector<8x256xbf16>
    %9 = math.exp %8 : vector<8x256xbf16>
    %cst_5 = arith.constant 1.000000e+00 : bf16
    %10 = vector.broadcast %cst_5 : bf16 to vector<8x256xbf16>
    %11 = arith.addf %10, %9 : vector<8x256xbf16>
    %12 = arith.divf %10, %11 : vector<8x256xbf16>
    %c0_6 = arith.constant 0 : index
    %c0_7 = arith.constant 0 : index
    %13 = vector.load %arg4[%c0_6, %c0_7] : memref<256x512xbf16, #tpu.memory_space<vmem>>, vector<256x512xbf16>
    %cst_8 = arith.constant dense<0.000000e+00> : vector<8x512xf32>
    %14 = tpu.matmul %12, %13, %cst_8 {dimension_numbers = #tpu.dot_dimension_numbers<[1], [0], [0], [1], [0, 0, 1, 1], [], []>} : vector<8x256xbf16>, vector<256x512xbf16>, vector<8x512xf32> -> vector<8x512xf32>
    %c0_9 = arith.constant 0 : index
    %c0_10 = arith.constant 0 : index
    %15 = vector.load %arg5[%c0_9, %c0_10] : memref<1x512xf32, #tpu.memory_space<vmem>>, vector<1x512xf32>
    %16 = vector.broadcast %15 : vector<1x512xf32> to vector<8x512xf32>
    %17 = arith.addf %14, %16 : vector<8x512xf32>
    %18 = arith.truncf %17 : vector<8x512xf32> to vector<8x512xbf16>
    %19 = arith.negf %18 : vector<8x512xbf16>
    %20 = math.exp %19 : vector<8x512xbf16>
    %cst_11 = arith.constant 1.000000e+00 : bf16
    %21 = vector.broadcast %cst_11 : bf16 to vector<8x512xbf16>
    %22 = arith.addf %21, %20 : vector<8x512xbf16>
    %23 = arith.divf %21, %22 : vector<8x512xbf16>
    %c0_12 = arith.constant 0 : index
    %c0_13 = arith.constant 0 : index
    %24 = vector.load %arg6[%c0_12, %c0_13] : memref<512x512xbf16, #tpu.memory_space<vmem>>, vector<512x512xbf16>
    %cst_14 = arith.constant dense<0.000000e+00> : vector<8x512xf32>
    %25 = tpu.matmul %23, %24, %cst_14 {dimension_numbers = #tpu.dot_dimension_numbers<[1], [0], [0], [1], [0, 0, 1, 1], [], []>} : vector<8x512xbf16>, vector<512x512xbf16>, vector<8x512xf32> -> vector<8x512xf32>
    %c0_15 = arith.constant 0 : index
    %c0_16 = arith.constant 0 : index
    %26 = vector.load %arg7[%c0_15, %c0_16] : memref<1x512xf32, #tpu.memory_space<vmem>>, vector<1x512xf32>
    %27 = vector.broadcast %26 : vector<1x512xf32> to vector<8x512xf32>
    %28 = arith.addf %25, %27 : vector<8x512xf32>
    %29 = arith.truncf %28 : vector<8x512xf32> to vector<8x512xbf16>
    %30 = arith.negf %29 : vector<8x512xbf16>
    %31 = math.exp %30 : vector<8x512xbf16>
    %cst_17 = arith.constant 1.000000e+00 : bf16
    %32 = vector.broadcast %cst_17 : bf16 to vector<8x512xbf16>
    %33 = arith.addf %32, %31 : vector<8x512xbf16>
    %34 = arith.divf %32, %33 : vector<8x512xbf16>
    %c0_18 = arith.constant 0 : index
    %c0_19 = arith.constant 0 : index
    %35 = vector.load %arg8[%c0_18, %c0_19] : memref<512x256xbf16, #tpu.memory_space<vmem>>, vector<512x256xbf16>
    %cst_20 = arith.constant dense<0.000000e+00> : vector<8x256xf32>
    %36 = tpu.matmul %34, %35, %cst_20 {dimension_numbers = #tpu.dot_dimension_numbers<[1], [0], [0], [1], [0, 0, 1, 1], [], []>} : vector<8x512xbf16>, vector<512x256xbf16>, vector<8x256xf32> -> vector<8x256xf32>
    %c0_21 = arith.constant 0 : index
    %c0_22 = arith.constant 0 : index
    %37 = vector.load %arg9[%c0_21, %c0_22] : memref<1x256xf32, #tpu.memory_space<vmem>>, vector<1x256xf32>
    %38 = vector.broadcast %37 : vector<1x256xf32> to vector<8x256xf32>
    %39 = arith.addf %36, %38 : vector<8x256xf32>
    %40 = arith.truncf %39 : vector<8x256xf32> to vector<8x256xbf16>
    %41 = arith.negf %40 : vector<8x256xbf16>
    %42 = math.exp %41 : vector<8x256xbf16>
    %cst_23 = arith.constant 1.000000e+00 : bf16
    %43 = vector.broadcast %cst_23 : bf16 to vector<8x256xbf16>
    %44 = arith.addf %43, %42 : vector<8x256xbf16>
    %45 = arith.divf %43, %44 : vector<8x256xbf16>
    %c0_24 = arith.constant 0 : index
    %c0_25 = arith.constant 0 : index
    %46 = vector.load %arg10[%c0_24, %c0_25] : memref<256x128xbf16, #tpu.memory_space<vmem>>, vector<256x128xbf16>
    %cst_26 = arith.constant dense<0.000000e+00> : vector<8x128xf32>
    %47 = tpu.matmul %45, %46, %cst_26 {dimension_numbers = #tpu.dot_dimension_numbers<[1], [0], [0], [1], [0, 0, 1, 1], [], []>} : vector<8x256xbf16>, vector<256x128xbf16>, vector<8x128xf32> -> vector<8x128xf32>
    %c0_27 = arith.constant 0 : index
    %c0_28 = arith.constant 0 : index
    %48 = vector.load %arg11[%c0_27, %c0_28] : memref<1x128xf32, #tpu.memory_space<vmem>>, vector<1x128xf32>
    %49 = vector.broadcast %48 : vector<1x128xf32> to vector<8x128xf32>
    %50 = arith.addf %47, %49 : vector<8x128xf32>
    %51 = arith.truncf %50 : vector<8x128xf32> to vector<8x128xbf16>
    %52 = arith.negf %51 : vector<8x128xbf16>
    %53 = math.exp %52 : vector<8x128xbf16>
    %cst_29 = arith.constant 1.000000e+00 : bf16
    %54 = vector.broadcast %cst_29 : bf16 to vector<8x128xbf16>
    %55 = arith.addf %54, %53 : vector<8x128xbf16>
    %56 = arith.divf %54, %55 : vector<8x128xbf16>
    %c0_30 = arith.constant 0 : index
    %c0_31 = arith.constant 0 : index
    %57 = vector.load %arg12[%c0_30, %c0_31] : memref<128x32xbf16, #tpu.memory_space<vmem>>, vector<128x32xbf16>
    %cst_32 = arith.constant dense<0.000000e+00> : vector<8x32xf32>
    %58 = tpu.matmul %56, %57, %cst_32 {dimension_numbers = #tpu.dot_dimension_numbers<[1], [0], [0], [1], [0, 0, 1, 1], [], []>} : vector<8x128xbf16>, vector<128x32xbf16>, vector<8x32xf32> -> vector<8x32xf32>
    %c0_33 = arith.constant 0 : index
    %c0_34 = arith.constant 0 : index
    %59 = vector.load %arg13[%c0_33, %c0_34] : memref<1x32xf32, #tpu.memory_space<vmem>>, vector<1x32xf32>
    %60 = vector.broadcast %59 : vector<1x32xf32> to vector<8x32xf32>
    %61 = arith.addf %58, %60 : vector<8x32xf32>
    %62 = arith.truncf %61 : vector<8x32xf32> to vector<8x32xbf16>
    %63 = arith.negf %62 : vector<8x32xbf16>
    %64 = math.exp %63 : vector<8x32xbf16>
    %cst_35 = arith.constant 1.000000e+00 : bf16
    %65 = vector.broadcast %cst_35 : bf16 to vector<8x32xbf16>
    %66 = arith.addf %65, %64 : vector<8x32xbf16>
    %67 = arith.divf %65, %66 : vector<8x32xbf16>
    %c0_36 = arith.constant 0 : index
    %c0_37 = arith.constant 0 : index
    %68 = vector.load %arg14[%c0_36, %c0_37] : memref<32x128xbf16, #tpu.memory_space<vmem>>, vector<32x128xbf16>
    %cst_38 = arith.constant dense<0.000000e+00> : vector<8x128xf32>
    %69 = tpu.matmul %67, %68, %cst_38 {dimension_numbers = #tpu.dot_dimension_numbers<[1], [0], [0], [1], [0, 0, 1, 1], [], []>} : vector<8x32xbf16>, vector<32x128xbf16>, vector<8x128xf32> -> vector<8x128xf32>
    %c0_39 = arith.constant 0 : index
    %c0_40 = arith.constant 0 : index
    %70 = vector.load %arg15[%c0_39, %c0_40] : memref<1x128xf32, #tpu.memory_space<vmem>>, vector<1x128xf32>
    %71 = vector.broadcast %70 : vector<1x128xf32> to vector<8x128xf32>
    %72 = arith.addf %69, %71 : vector<8x128xf32>
    %c0_41 = arith.constant 0 : index
    %c0_42 = arith.constant 0 : index
    %73 = vector.load %arg16[%c0_41, %c0_42] : memref<8x128xf32, #tpu.memory_space<vmem>>, vector<8x128xf32>
    tpu.vector_store %arg16[%c0_41, %c0_42], %72 {strides = array<i32>} : memref<8x128xf32, #tpu.memory_space<vmem>>, vector<8x128xf32>,
    return
  }
  func.func @transform_0(%arg0: i32) -> (i32, i32) {
    %c0_i32 = arith.constant 0 : i32
    %c0_i32_0 = arith.constant 0 : i32
    return %arg0, %c0_i32 : i32, i32
  }
  func.func @transform_1(%arg0: i32) -> (i32, i32) {
    %c0_i32 = arith.constant 0 : i32
    %c0_i32_0 = arith.constant 0 : i32
    %c0_i32_1 = arith.constant 0 : i32
    return %c0_i32, %c0_i32_0 : i32, i32
  }
  func.func @transform_2(%arg0: i32) -> (i32, i32) {
    %c0_i32 = arith.constant 0 : i32
    %c0_i32_0 = arith.constant 0 : i32
    %c0_i32_1 = arith.constant 0 : i32
    return %c0_i32, %c0_i32_0 : i32, i32
  }
  func.func @transform_3(%arg0: i32) -> (i32, i32) {
    %c0_i32 = arith.constant 0 : i32
    %c0_i32_0 = arith.constant 0 : i32
    %c0_i32_1 = arith.constant 0 : i32
    return %c0_i32, %c0_i32_0 : i32, i32
  }
  func.func @transform_4(%arg0: i32) -> (i32, i32) {
    %c0_i32 = arith.constant 0 : i32
    %c0_i32_0 = arith.constant 0 : i32
    %c0_i32_1 = arith.constant 0 : i32
    return %c0_i32, %c0_i32_0 : i32, i32
  }
  func.func @transform_5(%arg0: i32) -> (i32, i32) {
    %c0_i32 = arith.constant 0 : i32
    %c0_i32_0 = arith.constant 0 : i32
    %c0_i32_1 = arith.constant 0 : i32
    return %c0_i32, %c0_i32_0 : i32, i32
  }
  func.func @transform_6(%arg0: i32) -> (i32, i32) {
    %c0_i32 = arith.constant 0 : i32
    %c0_i32_0 = arith.constant 0 : i32
    %c0_i32_1 = arith.constant 0 : i32
    return %c0_i32, %c0_i32_0 : i32, i32
  }
  func.func @transform_7(%arg0: i32) -> (i32, i32) {
    %c0_i32 = arith.constant 0 : i32
    %c0_i32_0 = arith.constant 0 : i32
    %c0_i32_1 = arith.constant 0 : i32
    return %c0_i32, %c0_i32_0 : i32, i32
  }
  func.func @transform_8(%arg0: i32) -> (i32, i32) {
    %c0_i32 = arith.constant 0 : i32
    %c0_i32_0 = arith.constant 0 : i32
    %c0_i32_1 = arith.constant 0 : i32
    return %c0_i32, %c0_i32_0 : i32, i32
  }
  func.func @transform_9(%arg0: i32) -> (i32, i32) {
    %c0_i32 = arith.constant 0 : i32
    %c0_i32_0 = arith.constant 0 : i32
    %c0_i32_1 = arith.constant 0 : i32
    return %c0_i32, %c0_i32_0 : i32, i32
  }
  func.func @transform_10(%arg0: i32) -> (i32, i32) {
    %c0_i32 = arith.constant 0 : i32
    %c0_i32_0 = arith.constant 0 : i32
    %c0_i32_1 = arith.constant 0 : i32
    return %c0_i32, %c0_i32_0 : i32, i32
  }
  func.func @transform_11(%arg0: i32) -> (i32, i32) {
    %c0_i32 = arith.constant 0 : i32
    %c0_i32_0 = arith.constant 0 : i32
    %c0_i32_1 = arith.constant 0 : i32
    return %c0_i32, %c0_i32_0 : i32, i32
  }
  func.func @transform_12(%arg0: i32) -> (i32, i32) {
    %c0_i32 = arith.constant 0 : i32
    %c0_i32_0 = arith.constant 0 : i32
    %c0_i32_1 = arith.constant 0 : i32
    return %c0_i32, %c0_i32_0 : i32, i32
  }
  func.func @transform_13(%arg0: i32) -> (i32, i32) {
    %c0_i32 = arith.constant 0 : i32
    %c0_i32_0 = arith.constant 0 : i32
    %c0_i32_1 = arith.constant 0 : i32
    return %c0_i32, %c0_i32_0 : i32, i32
  }
  func.func @transform_14(%arg0: i32) -> (i32, i32) {
    %c0_i32 = arith.constant 0 : i32
    %c0_i32_0 = arith.constant 0 : i32
    %c0_i32_1 = arith.constant 0 : i32
    return %c0_i32, %c0_i32_0 : i32, i32
  }
  func.func @transform_15(%arg0: i32) -> (i32, i32) {
    %c0_i32 = arith.constant 0 : i32
    %c0_i32_0 = arith.constant 0 : i32
    return %arg0, %c0_i32 : i32, i32
  }
}

</mosaic_0001>

<llo_original>
// kernel: mlp_forward.1
$region0: #{mlp_forward.1}
  #allocation0 [shape = 'u32[]', space=smem, size = 0x4, offset = 0x4, fixed_abs, tag = 'smem constant byte address 0x4 - core index']
  #allocation1 [shape = 'u32[144,128]{1,0:T(1,128)}', space=vmem, size = 0x12000, scoped, tag = 'internal scratch']
  %s0 = inlined_call_operand.vmem [shape: f32[8,192], index: 0, kind: input, shape index: {}]
  %s1 = inlined_call_operand.hbm [shape: bf16[192,256], index: 1, kind: input, shape index: {}]
  %s2 = inlined_call_operand.vmem [shape: f32[1,256], index: 2, kind: input, shape index: {}]
  %s3 = inlined_call_operand.hbm [shape: bf16[256,512], index: 3, kind: input, shape index: {}]
  %s4 = inlined_call_operand.vmem [shape: f32[1,512], index: 4, kind: input, shape index: {}]
  %s5 = inlined_call_operand.hbm [shape: bf16[512,512], index: 5, kind: input, shape index: {}]
  %s6 = inlined_call_operand.vmem [shape: f32[1,512], index: 6, kind: input, shape index: {}]
  %s7 = inlined_call_operand.hbm [shape: bf16[512,256], index: 7, kind: input, shape index: {}]
  %s8 = inlined_call_operand.hbm [shape: f32[1,256], index: 8, kind: input, shape index: {}]
  %s9 = inlined_call_operand.vmem [shape: bf16[256,128], index: 9, kind: input, shape index: {}]
  %s10 = inlined_call_operand.vmem [shape: f32[1,128], index: 10, kind: input, shape index: {}]
  %s11 = inlined_call_operand.vmem [shape: bf16[128,32], index: 11, kind: input, shape index: {}]
  %s12 = inlined_call_operand.vmem [shape: f32[1,32], index: 12, kind: input, shape index: {}]
  %s13 = inlined_call_operand.vmem [shape: bf16[32,128], index: 13, kind: input, shape index: {}]
  %s14 = inlined_call_operand.vmem [shape: f32[1,128], index: 14, kind: input, shape index: {}]
  %s15 = inlined_call_operand.vmem [shape: f32[8,128], index: 15, kind: output, shape index: {}]
  %s16 = sld [smem:[#allocation0]]
  $region90: #{mlp_forward.1} parent=0
    _
  %s18 = ssub.s32 1, %s16
  %s19 = scalar_select 0, %s18, %s16
  $region1: #{mlp_forward.1} parent=0
    #allocation2 [shape = 'u8[98304]{0}', space=vmem, size = 0x18000, scoped, tag = 'input window, operand 1, single buffered']
    #allocation3 [shape = 's32[1]{0}', space=sflag, size = 0x4, scoped, tag = 'scoped memory for mlp_forward.1']
    #allocation4 [shape = 'u8[262144]{0}', space=vmem, size = 0x40000, scoped, tag = 'input window, operand 3, single buffered']
    #allocation5 [shape = 's32[1]{0}', space=sflag, size = 0x4, scoped, tag = 'scoped memory for mlp_forward.1']
    #allocation6 [shape = 'u8[524288]{0}', space=vmem, size = 0x80000, scoped, tag = 'input window, operand 5, single buffered']
    #allocation7 [shape = 'u8[262144]{0}', space=vmem, size = 0x40000, scoped, tag = 'input window, operand 7, single buffered']
    #allocation8 [shape = 's32[1]{0}', space=sflag, size = 0x4, scoped, tag = 'scoped memory for mlp_forward.1']
    #allocation9 [shape = 'u8[1024]{0}', space=vmem, size = 0x400, scoped, tag = 'input window, operand 8, single buffered']
    %20 = vsyncpa [#allocation3], 0
    %21 = vsyncpa [#allocation5], 0
    %22 = vsyncpa [#allocation8], 0
    // Predicated region
    $region2: #{mlp_forward.1} parent=1 // pred_check
      _
    $region3: #{mlp_forward.1} parent=1 // pred_check_branch
      %24 = sbr.rel (0) target = $region5
    $region4: #{mlp_forward.1} parent=1 // pred_region
      _
    $region5: #{mlp_forward.1} parent=1 // pred_fallthru
      _
    // Predicated region
    $region6: #{mlp_forward.1} parent=1 // pred_check
      _
    $region7: #{mlp_forward.1} parent=1 // pred_check_branch
      %26 = sbr.rel (0) target = $region9
    $region8: #{mlp_forward.1} parent=1 // pred_region
      %s28 = ssub.s32 3072, 3072
      %29 = vsyncadd [#allocation3], %s28
      %s30 = sshll.u32 [#allocation2], 4
      %s31 = int_to_ptr.vmem [resolvable:$true] %s30
      %36 = dma.hbm_to_vmem [thread:$0]  %s1, 3072, %s31, [#allocation3], 128, 128, 8
    $region9: #{mlp_forward.1} parent=1 // pred_fallthru
      _
    // Predicated region
    $region10: #{mlp_forward.1} parent=1 // pred_check
      _
    $region11: #{mlp_forward.1} parent=1 // pred_check_branch
      %38 = sbr.rel (0) target = $region13
    $region12: #{mlp_forward.1} parent=1 // pred_region
      _
    $region13: #{mlp_forward.1} parent=1 // pred_fallthru
      _
    // Predicated region
    $region14: #{mlp_forward.1} parent=1 // pred_check
      _
    $region15: #{mlp_forward.1} parent=1 // pred_check_branch
      %40 = sbr.rel (0) target = $region17
    $region16: #{mlp_forward.1} parent=1 // pred_region
      %s42 = ssub.s32 8192, 8192
      %43 = vsyncadd [#allocation5], %s42
      %s44 = sshll.u32 [#allocation4], 4
      %s45 = int_to_ptr.vmem [resolvable:$true] %s44
      %50 = dma.hbm_to_vmem [thread:$0]  %s3, 8192, %s45, [#allocation5], 256, 256, 16
    $region17: #{mlp_forward.1} parent=1 // pred_fallthru
      _
    // Predicated region
    $region18: #{mlp_forward.1} parent=1 // pred_check
      _
    $region19: #{mlp_forward.1} parent=1 // pred_check_branch
      %52 = sbr.rel (0) target = $region21
    $region20: #{mlp_forward.1} parent=1 // pred_region
      _
    $region21: #{mlp_forward.1} parent=1 // pred_fallthru
      _
    // Predicated region
    $region22: #{mlp_forward.1} parent=1 // pred_check
      _
    $region23: #{mlp_forward.1} parent=1 // pred_check_branch
      %54 = sbr.rel (0) target = $region25
    $region24: #{mlp_forward.1} parent=1 // pred_region
      %s56 = ssub.s32 16384, 16384
      %57 = vsyncadd [#allocation5], %s56
      %s58 = sshll.u32 [#allocation6], 4
      %s59 = int_to_ptr.vmem [resolvable:$true] %s58
      %64 = dma.hbm_to_vmem [thread:$0]  %s5, 16384, %s59, [#allocation5], 256, 256, 16
    $region25: #{mlp_forward.1} parent=1 // pred_fallthru
      _
    // Predicated region
    $region26: #{mlp_forward.1} parent=1 // pred_check
      _
    $region27: #{mlp_forward.1} parent=1 // pred_check_branch
      %66 = sbr.rel (0) target = $region29
    $region28: #{mlp_forward.1} parent=1 // pred_region
      _
    $region29: #{mlp_forward.1} parent=1 // pred_fallthru
      _
    // Predicated region
    $region30: #{mlp_forward.1} parent=1 // pred_check
      _
    $region31: #{mlp_forward.1} parent=1 // pred_check_branch
      %68 = sbr.rel (0) target = $region33
    $region32: #{mlp_forward.1} parent=1 // pred_region
      %s70 = ssub.s32 8192, 8192
      %71 = vsyncadd [#allocation8], %s70
      %s72 = sshll.u32 [#allocation7], 4
      %s73 = int_to_ptr.vmem [resolvable:$true] %s72
      %78 = dma.hbm_to_vmem [thread:$0]  %s7, 8192, %s73, [#allocation8], 128, 128, 8
    $region33: #{mlp_forward.1} parent=1 // pred_fallthru
      _
    // Predicated region
    $region34: #{mlp_forward.1} parent=1 // pred_check
      _
    $region35: #{mlp_forward.1} parent=1 // pred_check_branch
      %80 = sbr.rel (0) target = $region37
    $region36: #{mlp_forward.1} parent=1 // pred_region
      %s82 = ssub.s32 32, 32
      %83 = vsyncadd [#allocation8], %s82
      %s85 = sshll.u32 [#allocation9], 4
      %s86 = int_to_ptr.vmem [resolvable:$true] %s85
      %88 = dma.hbm_to_vmem [thread:$0]  %s8, 32, %s86, [#allocation8]
    $region37: #{mlp_forward.1} parent=1 // pred_fallthru
      _
    // Predicated region
    $region38: #{mlp_forward.1} parent=1 // pred_check
      _
    $region39: #{mlp_forward.1} parent=1 // pred_check_branch
      %90 = sbr.rel (0) target = $region41
    $region40: #{mlp_forward.1} parent=1 // pred_region
      _
    $region41: #{mlp_forward.1} parent=1 // pred_fallthru
      _
    // Predicated region
    $region42: #{mlp_forward.1} parent=1 // pred_check
      _
    $region43: #{mlp_forward.1} parent=1 // pred_check_branch
      %92 = sbr.rel (0) target = $region45
    $region44: #{mlp_forward.1} parent=1 // pred_region
      _
    $region45: #{mlp_forward.1} parent=1 // pred_fallthru
      _
    // Predicated region
    $region46: #{mlp_forward.1} parent=1 // pred_check
      _
    $region47: #{mlp_forward.1} parent=1 // pred_check_branch
      %94 = sbr.rel (0) target = $region49
    $region48: #{mlp_forward.1} parent=1 // pred_region
      _
    $region49: #{mlp_forward.1} parent=1 // pred_fallthru
      _
    // Predicated region
    $region50: #{mlp_forward.1} parent=1 // pred_check
      _
    $region51: #{mlp_forward.1} parent=1 // pred_check_branch
      %96 = sbr.rel (0) target = $region53
    $region52: #{mlp_forward.1} parent=1 // pred_region
      _
    $region53: #{mlp_forward.1} parent=1 // pred_fallthru
      _
    // Predicated region
    $region54: #{mlp_forward.1} parent=1 // pred_check
      _
    $region55: #{mlp_forward.1} parent=1 // pred_check_branch
      %98 = sbr.rel (0) target = $region57
    $region56: #{mlp_forward.1} parent=1 // pred_region
      _
    $region57: #{mlp_forward.1} parent=1 // pred_fallthru
      _
    // Predicated region
    $region58: #{mlp_forward.1} parent=1 // pred_check
      _
    $region59: #{mlp_forward.1} parent=1 // pred_check_branch
      %100 = sbr.rel (0) target = $region61
    $region60: #{mlp_forward.1} parent=1 // pred_region
      _
    $region61: #{mlp_forward.1} parent=1 // pred_fallthru
      _
    // Predicated region
    $region62: #{mlp_forward.1} parent=1 // pred_check
      _
    $region63: #{mlp_forward.1} parent=1 // pred_check_branch
      %102 = sbr.rel (0) target = $region65
    $region64: #{mlp_forward.1} parent=1 // pred_region
      %103 = dma.done [#allocation3], 3072
    $region65: #{mlp_forward.1} parent=1 // pred_fallthru
      _
    // Predicated region
    $region66: #{mlp_forward.1} parent=1 // pred_check
      _
    $region67: #{mlp_forward.1} parent=1 // pred_check_branch
      %105 = sbr.rel (0) target = $region69
    $region68: #{mlp_forward.1} parent=1 // pred_region
      %106 = dma.done [#allocation5], 8192
    $region69: #{mlp_forward.1} parent=1 // pred_fallthru
      _
    // Predicated region
    $region70: #{mlp_forward.1} parent=1 // pred_check
      _
    $region71: #{mlp_forward.1} parent=1 // pred_check_branch
      %108 = sbr.rel (0) target = $region73
    $region72: #{mlp_forward.1} parent=1 // pred_region
      %109 = dma.done [#allocation5], 16384
    $region73: #{mlp_forward.1} parent=1 // pred_fallthru
      _
    // Predicated region
    $region74: #{mlp_forward.1} parent=1 // pred_check
      _
    $region75: #{mlp_forward.1} parent=1 // pred_check_branch
      %111 = sbr.rel (0) target = $region77
    $region76: #{mlp_forward.1} parent=1 // pred_region
      %112 = dma.done [#allocation8], 8192
    $region77: #{mlp_forward.1} parent=1 // pred_fallthru
      _
    // Predicated region
    $region78: #{mlp_forward.1} parent=1 // pred_check
      _
    $region79: #{mlp_forward.1} parent=1 // pred_check_branch
      %114 = sbr.rel (0) target = $region81
    $region80: #{mlp_forward.1} parent=1 // pred_region
      %115 = dma.done [#allocation8], 32
    $region81: #{mlp_forward.1} parent=1 // pred_fallthru
      _
    %v118 = vld [vmem:[%s0] sm:$0xff]
    %v119 = vld [vmem:[%s0 + $0x8] sm:$0xff]
    %v120 = vpack.c.bf16 %v118, %v118
    %v121 = vpack.c.bf16 %v119, %v119
    %v122 = vld [vmem:[#allocation2] sm:$0xff]
    %v123 = vld [vmem:[#allocation2 + $0x8] sm:$0xff]
    %v124 = vld [vmem:[#allocation2 + $0x10] sm:$0xff]
    %v125 = vld [vmem:[#allocation2 + $0x18] sm:$0xff]
    %v126 = vld [vmem:[#allocation2 + $0x20] sm:$0xff]
    %v127 = vld [vmem:[#allocation2 + $0x28] sm:$0xff]
    %v128 = vld [vmem:[#allocation2 + $0x30] sm:$0xff]
    %v129 = vld [vmem:[#allocation2 + $0x38] sm:$0xff]
    %v130 = vld [vmem:[#allocation2 + $0x40] sm:$0xff]
    %v131 = vld [vmem:[#allocation2 + $0x48] sm:$0xff]
    %v132 = vld [vmem:[#allocation2 + $0x50] sm:$0xff]
    %v133 = vld [vmem:[#allocation2 + $0x58] sm:$0xff]
    %v134 = vld [vmem:[#allocation2 + $0x60] sm:$0xff]
    %v135 = vld [vmem:[#allocation2 + $0x68] sm:$0xff]
    %v136 = vld [vmem:[#allocation2 + $0x70] sm:$0xff]
    %v137 = vld [vmem:[#allocation2 + $0x78] sm:$0xff]
    %v138 = vld [vmem:[#allocation2 + $0x80] sm:$0xff]
    %v139 = vld [vmem:[#allocation2 + $0x88] sm:$0xff]
    %v140 = vld [vmem:[#allocation2 + $0x90] sm:$0xff]
    %v141 = vld [vmem:[#allocation2 + $0x98] sm:$0xff]
    %v142 = vld [vmem:[#allocation2 + $0xa0] sm:$0xff]
    %v143 = vld [vmem:[#allocation2 + $0xa8] sm:$0xff]
    %v144 = vld [vmem:[#allocation2 + $0xb0] sm:$0xff]
    %v145 = vld [vmem:[#allocation2 + $0xb8] sm:$0xff]
    %v146 = vld [vmem:[%s2] sm:$0x3]
    %v148 = vlaneseq
    %v149 = vshrl.u32 %v148, 7
    %v150 = vsub.s32 0, %v149
    %v151 = vrot.slane %v146, %v150
    %v152 = vlaneseq
    %v153 = vshrl.u32 %v152, 7
    %v154 = vsub.s32 1, %v153
    %v155 = vrot.slane %v146, %v154
    %v182 = vunpack.c.l.b16 %v122
    %v183 = vunpack.c.h.b16 %v122
    %v184 = vunpack.c.l.b16 %v123
    %v185 = vunpack.c.h.b16 %v123
    %v186 = vunpack.c.l.b16 %v124
    %v187 = vunpack.c.h.b16 %v124
    %v188 = vunpack.c.l.b16 %v125
    %v189 = vunpack.c.h.b16 %v125
    %v190 = vunpack.c.l.b16 %v126
    %v191 = vunpack.c.h.b16 %v126
    %v192 = vunpack.c.l.b16 %v127
    %v193 = vunpack.c.h.b16 %v127
    %v194 = vunpack.c.l.b16 %v128
    %v195 = vunpack.c.h.b16 %v128
    %v196 = vunpack.c.l.b16 %v129
    %v197 = vunpack.c.h.b16 %v129
    %v198 = vunpack.c.l.b16 %v130
    %v199 = vunpack.c.h.b16 %v130
    %v200 = vunpack.c.l.b16 %v131
    %v201 = vunpack.c.h.b16 %v131
    %v202 = vunpack.c.l.b16 %v132
    %v203 = vunpack.c.h.b16 %v132
    %v204 = vunpack.c.l.b16 %v133
    %v205 = vunpack.c.h.b16 %v133
    %v206 = vunpack.c.l.b16 %v134
    %v207 = vunpack.c.h.b16 %v134
    %v208 = vunpack.c.l.b16 %v135
    %v209 = vunpack.c.h.b16 %v135
    %v210 = vunpack.c.l.b16 %v136
    %v211 = vunpack.c.h.b16 %v136
    %v212 = vunpack.c.l.b16 %v137
    %v213 = vunpack.c.h.b16 %v137
    %v214 = vunpack.c.l.b16 %v138
    %v215 = vunpack.c.h.b16 %v138
    %v216 = vunpack.c.l.b16 %v139
    %v217 = vunpack.c.h.b16 %v139
    %v218 = vunpack.c.l.b16 %v140
    %v219 = vunpack.c.h.b16 %v140
    %v220 = vunpack.c.l.b16 %v141
    %v221 = vunpack.c.h.b16 %v141
    %v222 = vunpack.c.l.b16 %v142
    %v223 = vunpack.c.h.b16 %v142
    %v224 = vunpack.c.l.b16 %v143
    %v225 = vunpack.c.h.b16 %v143
    %v226 = vunpack.c.l.b16 %v144
    %v227 = vunpack.c.h.b16 %v144
    %v228 = vunpack.c.l.b16 %v145
    %v229 = vunpack.c.h.b16 %v145
    %v230 = vpack.c.b16 %v184, %v182
    %v231 = vpack.c.b16 %v185, %v183
    %v232 = vpack.c.b16 %v188, %v186
    %v233 = vpack.c.b16 %v189, %v187
    %v234 = vpack.c.b16 %v192, %v190
    %v235 = vpack.c.b16 %v193, %v191
    %v236 = vpack.c.b16 %v196, %v194
    %v237 = vpack.c.b16 %v197, %v195
    %v238 = vpack.c.b16 %v200, %v198
    %v239 = vpack.c.b16 %v201, %v199
    %v240 = vpack.c.b16 %v204, %v202
    %v241 = vpack.c.b16 %v205, %v203
    %v242 = vpack.c.b16 %v208, %v206
    %v243 = vpack.c.b16 %v209, %v207
    %v244 = vpack.c.b16 %v212, %v210
    %v245 = vpack.c.b16 %v213, %v211
    %v246 = vpack.c.b16 %v216, %v214
    %v247 = vpack.c.b16 %v217, %v215
    %v248 = vpack.c.b16 %v220, %v218
    %v249 = vpack.c.b16 %v221, %v219
    %v250 = vpack.c.b16 %v224, %v222
    %v251 = vpack.c.b16 %v225, %v223
    %v252 = vpack.c.b16 %v228, %v226
    %v253 = vpack.c.b16 %v229, %v227
    %vm278 = vcmask 523264
    %v280 = vsel %vm278, %v121, 0
    %282 = vmatprep.subr.bf16.mxu0 %v245
    %283 = vmatpush1.bf16.msra.mxu0 %v244
    %284 = vmatprep.subr.bf16.mxu0 %v243
    %285 = vmatpush1.bf16.msra.mxu0 %v242
    %286 = vmatprep.subr.bf16.mxu0 %v241
    %287 = vmatpush1.bf16.msra.mxu0 %v240
    %288 = vmatprep.subr.bf16.mxu0 %v239
    %289 = vmatpush1.bf16.msra.mxu0 %v238
    %290 = vmatprep.subr.bf16.mxu0 %v237
    %291 = vmatpush1.bf16.msra.mxu0 %v236
    %292 = vmatprep.subr.bf16.mxu0 %v235
    %293 = vmatpush1.bf16.msra.mxu0 %v234
    %294 = vmatprep.subr.bf16.mxu0 %v233
    %295 = vmatpush1.bf16.msra.mxu0 %v232
    %296 = vmatprep.subr.bf16.mxu0 %v231
    %297 = vmatpush1.bf16.msra.mxu0 %v230
    %298 = vmatprep.subr.bf16.mxu0 0
    %299 = vmatpush2.bf16.msra.mxu0 0
    %300 = vmatprep.subr.bf16.mxu0 0
    %301 = vmatpush2.bf16.msra.mxu0 0
    %302 = vmatprep.subr.bf16.mxu0 0
    %303 = vmatpush2.bf16.msra.mxu0 0
    %304 = vmatprep.subr.bf16.mxu0 0
    %305 = vmatpush2.bf16.msra.mxu0 0
    %306 = vmatprep.subr.bf16.mxu0 %v253
    %307 = vmatpush2.bf16.msra.mxu0 %v252
    %308 = vmatprep.subr.bf16.mxu0 %v251
    %309 = vmatpush2.bf16.msra.mxu0 %v250
    %310 = vmatprep.subr.bf16.mxu0 %v249
    %311 = vmatpush2.bf16.msra.mxu0 %v248
    %312 = vmatprep.subr.bf16.mxu0 %v247
    %313 = vmatpush2.bf16.msra.mxu0 %v246
    %314 = vmatprep.mubr.bf16.mxu0 %v280
    %315 = vmatmul.mubr.bf16.gmra.mxu0 %v120
    %v316 = vpop.f32.mrf.mxu0
    %v317 = vadd.f32 %v151, %v316
    %v318 = vpop.f32.mrf.mxu0
    %v319 = vadd.f32 %v155, %v318
    %v320 = vpop.f32.mrf.mxu0
    %v321 = vpop.f32.mrf.mxu0
    %322 = vdwg.mxu0
    %v323 = vpack.c.bf16 %v317, %v317
    %v324 = vpack.c.bf16 %v319, %v319
    %v325 = vxor.u32 %v323, 2147516416
    %v326 = vxor.u32 %v324, 2147516416
    %v328 = vmul.bf16 %v325, 1069105081
    %v329 = vpow.bf16.pop %v328
    %v331 = vmul.bf16 %v326, 1069105081
    %v332 = vpow.bf16.pop %v331
    %v333 = vadd.bf16 %v329, 1065369472
    %v334 = vadd.bf16 %v332, 1065369472
    %v335 = vrcp.bf16.pop %v333
    %v336 = vmul.bf16 1065369472, %v335
    %v337 = vrcp.bf16.pop %v334
    %v338 = vmul.bf16 1065369472, %v337
    %v339 = vld [vmem:[#allocation4] sm:$0xff]
    %v340 = vld [vmem:[#allocation4 + $0x8] sm:$0xff]
    %v341 = vld [vmem:[#allocation4 + $0x10] sm:$0xff]
    %v342 = vld [vmem:[#allocation4 + $0x18] sm:$0xff]
    %v343 = vld [vmem:[#allocation4 + $0x20] sm:$0xff]
    %v344 = vld [vmem:[#allocation4 + $0x28] sm:$0xff]
    %v345 = vld [vmem:[#allocation4 + $0x30] sm:$0xff]
    %v346 = vld [vmem:[#allocation4 + $0x38] sm:$0xff]
    %v347 = vld [vmem:[#allocation4 + $0x40] sm:$0xff]
    %v348 = vld [vmem:[#allocation4 + $0x48] sm:$0xff]
    %v349 = vld [vmem:[#allocation4 + $0x50] sm:$0xff]
    %v350 = vld [vmem:[#allocation4 + $0x58] sm:$0xff]
    %v351 = vld [vmem:[#allocation4 + $0x60] sm:$0xff]
    %v352 = vld [vmem:[#allocation4 + $0x68] sm:$0xff]
    %v353 = vld [vmem:[#allocation4 + $0x70] sm:$0xff]
    %v354 = vld [vmem:[#allocation4 + $0x78] sm:$0xff]
    %v355 = vld [vmem:[#allocation4 + $0x80] sm:$0xff]
    %v356 = vld [vmem:[#allocation4 + $0x88] sm:$0xff]
    %v357 = vld [vmem:[#allocation4 + $0x90] sm:$0xff]
    %v358 = vld [vmem:[#allocation4 + $0x98] sm:$0xff]
    %v359 = vld [vmem:[#allocation4 + $0xa0] sm:$0xff]
    %v360 = vld [vmem:[#allocation4 + $0xa8] sm:$0xff]
    %v361 = vld [vmem:[#allocation4 + $0xb0] sm:$0xff]
    %v362 = vld [vmem:[#allocation4 + $0xb8] sm:$0xff]
    %v363 = vld [vmem:[#allocation4 + $0xc0] sm:$0xff]
    %v364 = vld [vmem:[#allocation4 + $0xc8] sm:$0xff]
    %v365 = vld [vmem:[#allocation4 + $0xd0] sm:$0xff]
    %v366 = vld [vmem:[#allocation4 + $0xd8] sm:$0xff]
    %v367 = vld [vmem:[#allocation4 + $0xe0] sm:$0xff]
    %v368 = vld [vmem:[#allocation4 + $0xe8] sm:$0xff]
    %v369 = vld [vmem:[#allocation4 + $0xf0] sm:$0xff]
    %v370 = vld [vmem:[#allocation4 + $0xf8] sm:$0xff]
    %v371 = vld [vmem:[#allocation4 + $0x100] sm:$0xff]
    %v372 = vld [vmem:[#allocation4 + $0x108] sm:$0xff]
    %v373 = vld [vmem:[#allocation4 + $0x110] sm:$0xff]
    %v374 = vld [vmem:[#allocation4 + $0x118] sm:$0xff]
    %v375 = vld [vmem:[#allocation4 + $0x120] sm:$0xff]
    %v376 = vld [vmem:[#allocation4 + $0x128] sm:$0xff]
    %v377 = vld [vmem:[#allocation4 + $0x130] sm:$0xff]
    %v378 = vld [vmem:[#allocation4 + $0x138] sm:$0xff]
    %v379 = vld [vmem:[#allocation4 + $0x140] sm:$0xff]
    %v380 = vld [vmem:[#allocation4 + $0x148] sm:$0xff]
    %v381 = vld [vmem:[#allocation4 + $0x150] sm:$0xff]
    %v382 = vld [vmem:[#allocation4 + $0x158] sm:$0xff]
    %v383 = vld [vmem:[#allocation4 + $0x160] sm:$0xff]
    %v384 = vld [vmem:[#allocation4 + $0x168] sm:$0xff]
    %v385 = vld [vmem:[#allocation4 + $0x170] sm:$0xff]
    %v386 = vld [vmem:[#allocation4 + $0x178] sm:$0xff]
    %v387 = vld [vmem:[#allocation4 + $0x180] sm:$0xff]
    %v388 = vld [vmem:[#allocation4 + $0x188] sm:$0xff]
    %v389 = vld [vmem:[#allocation4 + $0x190] sm:$0xff]
    %v390 = vld [vmem:[#allocation4 + $0x198] sm:$0xff]
    %v391 = vld [vmem:[#allocation4 + $0x1a0] sm:$0xff]
    %v392 = vld [vmem:[#allocation4 + $0x1a8] sm:$0xff]
    %v393 = vld [vmem:[#allocation4 + $0x1b0] sm:$0xff]
    %v394 = vld [vmem:[#allocation4 + $0x1b8] sm:$0xff]
    %v395 = vld [vmem:[#allocation4 + $0x1c0] sm:$0xff]
    %v396 = vld [vmem:[#allocation4 + $0x1c8] sm:$0xff]
    %v397 = vld [vmem:[#allocation4 + $0x1d0] sm:$0xff]
    %v398 = vld [vmem:[#allocation4 + $0x1d8] sm:$0xff]
    %v399 = vld [vmem:[#allocation4 + $0x1e0] sm:$0xff]
    %v400 = vld [vmem:[#allocation4 + $0x1e8] sm:$0xff]
    %v401 = vld [vmem:[#allocation4 + $0x1f0] sm:$0xff]
    %v402 = vld [vmem:[#allocation4 + $0x1f8] sm:$0xff]
    %v403 = vld [vmem:[%s4] sm:$0xf]
    %v405 = vlaneseq
    %v406 = vshrl.u32 %v405, 7
    %v407 = vsub.s32 0, %v406
    %v408 = vrot.slane %v403, %v407
    %v409 = vlaneseq
    %v410 = vshrl.u32 %v409, 7
    %v411 = vsub.s32 1, %v410
    %v412 = vrot.slane %v403, %v411
    %v413 = vlaneseq
    %v414 = vshrl.u32 %v413, 7
    %v415 = vsub.s32 2, %v414
    %v416 = vrot.slane %v403, %v415
    %v417 = vlaneseq
    %v418 = vshrl.u32 %v417, 7
    %v419 = vsub.s32 3, %v418
    %v420 = vrot.slane %v403, %v419
    %v489 = vunpack.c.l.b16 %v339
    %v490 = vunpack.c.h.b16 %v339
    %v491 = vunpack.c.l.b16 %v340
    %v492 = vunpack.c.h.b16 %v340
    %v493 = vunpack.c.l.b16 %v341
    %v494 = vunpack.c.h.b16 %v341
    %v495 = vunpack.c.l.b16 %v342
    %v496 = vunpack.c.h.b16 %v342
    %v497 = vunpack.c.l.b16 %v343
    %v498 = vunpack.c.h.b16 %v343
    %v499 = vunpack.c.l.b16 %v344
    %v500 = vunpack.c.h.b16 %v344
    %v501 = vunpack.c.l.b16 %v345
    %v502 = vunpack.c.h.b16 %v345
    %v503 = vunpack.c.l.b16 %v346
    %v504 = vunpack.c.h.b16 %v346
    %v505 = vunpack.c.l.b16 %v347
    %v506 = vunpack.c.h.b16 %v347
    %v507 = vunpack.c.l.b16 %v348
    %v508 = vunpack.c.h.b16 %v348
    %v509 = vunpack.c.l.b16 %v349
    %v510 = vunpack.c.h.b16 %v349
    %v511 = vunpack.c.l.b16 %v350
    %v512 = vunpack.c.h.b16 %v350
    %v513 = vunpack.c.l.b16 %v351
    %v514 = vunpack.c.h.b16 %v351
    %v515 = vunpack.c.l.b16 %v352
    %v516 = vunpack.c.h.b16 %v352
    %v517 = vunpack.c.l.b16 %v353
    %v518 = vunpack.c.h.b16 %v353
    %v519 = vunpack.c.l.b16 %v354
    %v520 = vunpack.c.h.b16 %v354
    %v521 = vunpack.c.l.b16 %v355
    %v522 = vunpack.c.h.b16 %v355
    %v523 = vunpack.c.l.b16 %v356
    %v524 = vunpack.c.h.b16 %v356
    %v525 = vunpack.c.l.b16 %v357
    %v526 = vunpack.c.h.b16 %v357
    %v527 = vunpack.c.l.b16 %v358
    %v528 = vunpack.c.h.b16 %v358
    %v529 = vunpack.c.l.b16 %v359
    %v530 = vunpack.c.h.b16 %v359
    %v531 = vunpack.c.l.b16 %v360
    %v532 = vunpack.c.h.b16 %v360
    %v533 = vunpack.c.l.b16 %v361
    %v534 = vunpack.c.h.b16 %v361
    %v535 = vunpack.c.l.b16 %v362
    %v536 = vunpack.c.h.b16 %v362
    %v537 = vunpack.c.l.b16 %v363
    %v538 = vunpack.c.h.b16 %v363
    %v539 = vunpack.c.l.b16 %v364
    %v540 = vunpack.c.h.b16 %v364
    %v541 = vunpack.c.l.b16 %v365
    %v542 = vunpack.c.h.b16 %v365
    %v543 = vunpack.c.l.b16 %v366
    %v544 = vunpack.c.h.b16 %v366
    %v545 = vunpack.c.l.b16 %v367
    %v546 = vunpack.c.h.b16 %v367
    %v547 = vunpack.c.l.b16 %v368
    %v548 = vunpack.c.h.b16 %v368
    %v549 = vunpack.c.l.b16 %v369
    %v550 = vunpack.c.h.b16 %v369
    %v551 = vunpack.c.l.b16 %v370
    %v552 = vunpack.c.h.b16 %v370
    %v553 = vunpack.c.l.b16 %v371
    %v554 = vunpack.c.h.b16 %v371
    %v555 = vunpack.c.l.b16 %v372
    %v556 = vunpack.c.h.b16 %v372
    %v557 = vunpack.c.l.b16 %v373
    %v558 = vunpack.c.h.b16 %v373
    %v559 = vunpack.c.l.b16 %v374
    %v560 = vunpack.c.h.b16 %v374
    %v561 = vunpack.c.l.b16 %v375
    %v562 = vunpack.c.h.b16 %v375
    %v563 = vunpack.c.l.b16 %v376
    %v564 = vunpack.c.h.b16 %v376
    %v565 = vunpack.c.l.b16 %v377
    %v566 = vunpack.c.h.b16 %v377
    %v567 = vunpack.c.l.b16 %v378
    %v568 = vunpack.c.h.b16 %v378
    %v569 = vunpack.c.l.b16 %v379
    %v570 = vunpack.c.h.b16 %v379
    %v571 = vunpack.c.l.b16 %v380
    %v572 = vunpack.c.h.b16 %v380
    %v573 = vunpack.c.l.b16 %v381
    %v574 = vunpack.c.h.b16 %v381
    %v575 = vunpack.c.l.b16 %v382
    %v576 = vunpack.c.h.b16 %v382
    %v577 = vunpack.c.l.b16 %v383
    %v578 = vunpack.c.h.b16 %v383
    %v579 = vunpack.c.l.b16 %v384
    %v580 = vunpack.c.h.b16 %v384
    %v581 = vunpack.c.l.b16 %v385
    %v582 = vunpack.c.h.b16 %v385
    %v583 = vunpack.c.l.b16 %v386
    %v584 = vunpack.c.h.b16 %v386
    %v585 = vunpack.c.l.b16 %v387
    %v586 = vunpack.c.h.b16 %v387
    %v587 = vunpack.c.l.b16 %v388
    %v588 = vunpack.c.h.b16 %v388
    %v589 = vunpack.c.l.b16 %v389
    %v590 = vunpack.c.h.b16 %v389
    %v591 = vunpack.c.l.b16 %v390
    %v592 = vunpack.c.h.b16 %v390
    %v593 = vunpack.c.l.b16 %v391
    %v594 = vunpack.c.h.b16 %v391
    %v595 = vunpack.c.l.b16 %v392
    %v596 = vunpack.c.h.b16 %v392
    %v597 = vunpack.c.l.b16 %v393
    %v598 = vunpack.c.h.b16 %v393
    %v599 = vunpack.c.l.b16 %v394
    %v600 = vunpack.c.h.b16 %v394
    %v601 = vunpack.c.l.b16 %v395
    %v602 = vunpack.c.h.b16 %v395
    %v603 = vunpack.c.l.b16 %v396
    %v604 = vunpack.c.h.b16 %v396
    %v605 = vunpack.c.l.b16 %v397
    %v606 = vunpack.c.h.b16 %v397
    %v607 = vunpack.c.l.b16 %v398
    %v608 = vunpack.c.h.b16 %v398
    %v609 = vunpack.c.l.b16 %v399
    %v610 = vunpack.c.h.b16 %v399
    %v611 = vunpack.c.l.b16 %v400
    %v612 = vunpack.c.h.b16 %v400
    %v613 = vunpack.c.l.b16 %v401
    %v614 = vunpack.c.h.b16 %v401
    %v615 = vunpack.c.l.b16 %v402
    %v616 = vunpack.c.h.b16 %v402
    %v617 = vpack.c.b16 %v493, %v489
    %v618 = vpack.c.b16 %v494, %v490
    %v619 = vpack.c.b16 %v495, %v491
    %v620 = vpack.c.b16 %v496, %v492
    %v621 = vpack.c.b16 %v501, %v497
    %v622 = vpack.c.b16 %v502, %v498
    %v623 = vpack.c.b16 %v503, %v499
    %v624 = vpack.c.b16 %v504, %v500
    %v625 = vpack.c.b16 %v509, %v505
    %v626 = vpack.c.b16 %v510, %v506
    %v627 = vpack.c.b16 %v511, %v507
    %v628 = vpack.c.b16 %v512, %v508
    %v629 = vpack.c.b16 %v517, %v513
    %v630 = vpack.c.b16 %v518, %v514
    %v631 = vpack.c.b16 %v519, %v515
    %v632 = vpack.c.b16 %v520, %v516
    %v633 = vpack.c.b16 %v525, %v521
    %v634 = vpack.c.b16 %v526, %v522
    %v635 = vpack.c.b16 %v527, %v523
    %v636 = vpack.c.b16 %v528, %v524
    %v637 = vpack.c.b16 %v533, %v529
    %v638 = vpack.c.b16 %v534, %v530
    %v639 = vpack.c.b16 %v535, %v531
    %v640 = vpack.c.b16 %v536, %v532
    %v641 = vpack.c.b16 %v541, %v537
    %v642 = vpack.c.b16 %v542, %v538
    %v643 = vpack.c.b16 %v543, %v539
    %v644 = vpack.c.b16 %v544, %v540
    %v645 = vpack.c.b16 %v549, %v545
    %v646 = vpack.c.b16 %v550, %v546
    %v647 = vpack.c.b16 %v551, %v547
    %v648 = vpack.c.b16 %v552, %v548
    %v649 = vpack.c.b16 %v557, %v553
    %v650 = vpack.c.b16 %v558, %v554
    %v651 = vpack.c.b16 %v559, %v555
    %v652 = vpack.c.b16 %v560, %v556
    %v653 = vpack.c.b16 %v565, %v561
    %v654 = vpack.c.b16 %v566, %v562
    %v655 = vpack.c.b16 %v567, %v563
    %v656 = vpack.c.b16 %v568, %v564
    %v657 = vpack.c.b16 %v573, %v569
    %v658 = vpack.c.b16 %v574, %v570
    %v659 = vpack.c.b16 %v575, %v571
    %v660 = vpack.c.b16 %v576, %v572
    %v661 = vpack.c.b16 %v581, %v577
    %v662 = vpack.c.b16 %v582, %v578
    %v663 = vpack.c.b16 %v583, %v579
    %v664 = vpack.c.b16 %v584, %v580
    %v665 = vpack.c.b16 %v589, %v585
    %v666 = vpack.c.b16 %v590, %v586
    %v667 = vpack.c.b16 %v591, %v587
    %v668 = vpack.c.b16 %v592, %v588
    %v669 = vpack.c.b16 %v597, %v593
    %v670 = vpack.c.b16 %v598, %v594
    %v671 = vpack.c.b16 %v599, %v595
    %v672 = vpack.c.b16 %v600, %v596
    %v673 = vpack.c.b16 %v605, %v601
    %v674 = vpack.c.b16 %v606, %v602
    %v675 = vpack.c.b16 %v607, %v603
    %v676 = vpack.c.b16 %v608, %v604
    %v677 = vpack.c.b16 %v613, %v609
    %v678 = vpack.c.b16 %v614, %v610
    %v679 = vpack.c.b16 %v615, %v611
    %v680 = vpack.c.b16 %v616, %v612
    %745 = vmatprep.subr.bf16.mxu0 %v646
    %746 = vmatpush1.bf16.msra.mxu0 %v645
    %747 = vmatprep.subr.bf16.mxu0 %v642
    %748 = vmatpush1.bf16.msra.mxu0 %v641
    %749 = vmatprep.subr.bf16.mxu0 %v638
    %750 = vmatpush1.bf16.msra.mxu0 %v637
    %751 = vmatprep.subr.bf16.mxu0 %v634
    %752 = vmatpush1.bf16.msra.mxu0 %v633
    %753 = vmatprep.subr.bf16.mxu0 %v630
    %754 = vmatpush1.bf16.msra.mxu0 %v629
    %755 = vmatprep.subr.bf16.mxu0 %v626
    %756 = vmatpush1.bf16.msra.mxu0 %v625
    %757 = vmatprep.subr.bf16.mxu0 %v622
    %758 = vmatpush1.bf16.msra.mxu0 %v621
    %759 = vmatprep.subr.bf16.mxu0 %v618
    %760 = vmatpush1.bf16.msra.mxu0 %v617
    %761 = vmatprep.subr.bf16.mxu0 %v678
    %762 = vmatpush2.bf16.msra.mxu0 %v677
    %763 = vmatprep.subr.bf16.mxu0 %v674
    %764 = vmatpush2.bf16.msra.mxu0 %v673
    %765 = vmatprep.subr.bf16.mxu0 %v670
    %766 = vmatpush2.bf16.msra.mxu0 %v669
    %767 = vmatprep.subr.bf16.mxu0 %v666
    %768 = vmatpush2.bf16.msra.mxu0 %v665
    %769 = vmatprep.subr.bf16.mxu0 %v662
    %770 = vmatpush2.bf16.msra.mxu0 %v661
    %771 = vmatprep.subr.bf16.mxu0 %v658
    %772 = vmatpush2.bf16.msra.mxu0 %v657
    %773 = vmatprep.subr.bf16.mxu0 %v654
    %774 = vmatpush2.bf16.msra.mxu0 %v653
    %775 = vmatprep.subr.bf16.mxu0 %v650
    %776 = vmatpush2.bf16.msra.mxu0 %v649
    %777 = vmatprep.mubr.bf16.mxu0 %v338
    %778 = vmatmul.mubr.bf16.gmra.mxu0 %v336
    %v779 = vpop.f32.mrf.mxu0
    %v780 = vadd.f32 %v408, %v779
    %v781 = vpop.f32.mrf.mxu0
    %v782 = vadd.f32 %v412, %v781
    %v783 = vpop.f32.mrf.mxu0
    %v784 = vpop.f32.mrf.mxu0
    %785 = vdwg.mxu0
    %786 = vmatprep.subr.bf16.mxu0 %v648
    %787 = vmatpush1.bf16.msra.mxu0 %v647
    %788 = vmatprep.subr.bf16.mxu0 %v644
    %789 = vmatpush1.bf16.msra.mxu0 %v643
    %790 = vmatprep.subr.bf16.mxu0 %v640
    %791 = vmatpush1.bf16.msra.mxu0 %v639
    %792 = vmatprep.subr.bf16.mxu0 %v636
    %793 = vmatpush1.bf16.msra.mxu0 %v635
    %794 = vmatprep.subr.bf16.mxu0 %v632
    %795 = vmatpush1.bf16.msra.mxu0 %v631
    %796 = vmatprep.subr.bf16.mxu0 %v628
    %797 = vmatpush1.bf16.msra.mxu0 %v627
    %798 = vmatprep.subr.bf16.mxu0 %v624
    %799 = vmatpush1.bf16.msra.mxu0 %v623
    %800 = vmatprep.subr.bf16.mxu0 %v620
    %801 = vmatpush1.bf16.msra.mxu0 %v619
    %802 = vmatprep.subr.bf16.mxu0 %v680
    %803 = vmatpush2.bf16.msra.mxu0 %v679
    %804 = vmatprep.subr.bf16.mxu0 %v676
    %805 = vmatpush2.bf16.msra.mxu0 %v675
    %806 = vmatprep.subr.bf16.mxu0 %v672
    %807 = vmatpush2.bf16.msra.mxu0 %v671
    %808 = vmatprep.subr.bf16.mxu0 %v668
    %809 = vmatpush2.bf16.msra.mxu0 %v667
    %810 = vmatprep.subr.bf16.mxu0 %v664
    %811 = vmatpush2.bf16.msra.mxu0 %v663
    %812 = vmatprep.subr.bf16.mxu0 %v660
    %813 = vmatpush2.bf16.msra.mxu0 %v659
    %814 = vmatprep.subr.bf16.mxu0 %v656
    %815 = vmatpush2.bf16.msra.mxu0 %v655
    %816 = vmatprep.subr.bf16.mxu0 %v652
    %817 = vmatpush2.bf16.msra.mxu0 %v651
    %818 = vmatprep.mubr.bf16.mxu0 %v338
    %819 = vmatmul.mubr.bf16.gmra.mxu0 %v336
    %v820 = vpop.f32.mrf.mxu0
    %v821 = vadd.f32 %v416, %v820
    %v822 = vpop.f32.mrf.mxu0
    %v823 = vadd.f32 %v420, %v822
    %v824 = vpop.f32.mrf.mxu0
    %v825 = vpop.f32.mrf.mxu0
    %826 = vdwg.mxu0
    %v827 = vpack.c.bf16 %v780, %v780
    %v828 = vpack.c.bf16 %v782, %v782
    %v829 = vpack.c.bf16 %v821, %v821
    %v830 = vpack.c.bf16 %v823, %v823
    %v831 = vxor.u32 %v827, 2147516416
    %v832 = vxor.u32 %v828, 2147516416
    %v833 = vxor.u32 %v829, 2147516416
    %v834 = vxor.u32 %v830, 2147516416
    %v836 = vmul.bf16 %v831, 1069105081
    %v837 = vpow.bf16.pop %v836
    %v839 = vmul.bf16 %v832, 1069105081
    %v840 = vpow.bf16.pop %v839
    %v842 = vmul.bf16 %v833, 1069105081
    %v843 = vpow.bf16.pop %v842
    %v845 = vmul.bf16 %v834, 1069105081
    %v846 = vpow.bf16.pop %v845
    %v847 = vadd.bf16 %v837, 1065369472
    %v848 = vadd.bf16 %v840, 1065369472
    %v849 = vadd.bf16 %v843, 1065369472
    %v850 = vadd.bf16 %v846, 1065369472
    %v851 = vrcp.bf16.pop %v847
    %v852 = vmul.bf16 1065369472, %v851
    %v853 = vrcp.bf16.pop %v848
    %v854 = vmul.bf16 1065369472, %v853
    %v855 = vrcp.bf16.pop %v849
    %v856 = vmul.bf16 1065369472, %v855
    %v857 = vrcp.bf16.pop %v850
    %v858 = vmul.bf16 1065369472, %v857
    %v859 = vld [vmem:[#allocation6] sm:$0xff]
    %v860 = vld [vmem:[#allocation6 + $0x8] sm:$0xff]
    %v861 = vld [vmem:[#allocation6 + $0x10] sm:$0xff]
    %v862 = vld [vmem:[#allocation6 + $0x18] sm:$0xff]
    %v863 = vld [vmem:[#allocation6 + $0x20] sm:$0xff]
    %v864 = vld [vmem:[#allocation6 + $0x28] sm:$0xff]
    %v865 = vld [vmem:[#allocation6 + $0x30] sm:$0xff]
    %v866 = vld [vmem:[#allocation6 + $0x38] sm:$0xff]
    %v867 = vld [vmem:[#allocation6 + $0x40] sm:$0xff]
    %v868 = vld [vmem:[#allocation6 + $0x48] sm:$0xff]
    %v869 = vld [vmem:[#allocation6 + $0x50] sm:$0xff]
    %v870 = vld [vmem:[#allocation6 + $0x58] sm:$0xff]
    %v871 = vld [vmem:[#allocation6 + $0x60] sm:$0xff]
    %v872 = vld [vmem:[#allocation6 + $0x68] sm:$0xff]
    %v873 = vld [vmem:[#allocation6 + $0x70] sm:$0xff]
    %v874 = vld [vmem:[#allocation6 + $0x78] sm:$0xff]
    %v875 = vld [vmem:[#allocation6 + $0x80] sm:$0xff]
    %v876 = vld [vmem:[#allocation6 + $0x88] sm:$0xff]
    %v877 = vld [vmem:[#allocation6 + $0x90] sm:$0xff]
    %v878 = vld [vmem:[#allocation6 + $0x98] sm:$0xff]
    %v879 = vld [vmem:[#allocation6 + $0xa0] sm:$0xff]
    %v880 = vld [vmem:[#allocation6 + $0xa8] sm:$0xff]
    %v881 = vld [vmem:[#allocation6 + $0xb0] sm:$0xff]
    %v882 = vld [vmem:[#allocation6 + $0xb8] sm:$0xff]
    %v883 = vld [vmem:[#allocation6 + $0xc0] sm:$0xff]
    %v884 = vld [vmem:[#allocation6 + $0xc8] sm:$0xff]
    %v885 = vld [vmem:[#allocation6 + $0xd0] sm:$0xff]
    %v886 = vld [vmem:[#allocation6 + $0xd8] sm:$0xff]
    %v887 = vld [vmem:[#allocation6 + $0xe0] sm:$0xff]
    %v888 = vld [vmem:[#allocation6 + $0xe8] sm:$0xff]
    %v889 = vld [vmem:[#allocation6 + $0xf0] sm:$0xff]
    %v890 = vld [vmem:[#allocation6 + $0xf8] sm:$0xff]
    %v891 = vld [vmem:[#allocation6 + $0x100] sm:$0xff]
    %v892 = vld [vmem:[#allocation6 + $0x108] sm:$0xff]
    %v893 = vld [vmem:[#allocation6 + $0x110] sm:$0xff]
    %v894 = vld [vmem:[#allocation6 + $0x118] sm:$0xff]
    %v895 = vld [vmem:[#allocation6 + $0x120] sm:$0xff]
    %v896 = vld [vmem:[#allocation6 + $0x128] sm:$0xff]
    %v897 = vld [vmem:[#allocation6 + $0x130] sm:$0xff]
    %v898 = vld [vmem:[#allocation6 + $0x138] sm:$0xff]
    %v899 = vld [vmem:[#allocation6 + $0x140] sm:$0xff]
    %v900 = vld [vmem:[#allocation6 + $0x148] sm:$0xff]
    %v901 = vld [vmem:[#allocation6 + $0x150] sm:$0xff]
    %v902 = vld [vmem:[#allocation6 + $0x158] sm:$0xff]
    %v903 = vld [vmem:[#allocation6 + $0x160] sm:$0xff]
    %v904 = vld [vmem:[#allocation6 + $0x168] sm:$0xff]
    %v905 = vld [vmem:[#allocation6 + $0x170] sm:$0xff]
    %v906 = vld [vmem:[#allocation6 + $0x178] sm:$0xff]
    %v907 = vld [vmem:[#allocation6 + $0x180] sm:$0xff]
    %v908 = vld [vmem:[#allocation6 + $0x188] sm:$0xff]
    %v909 = vld [vmem:[#allocation6 + $0x190] sm:$0xff]
    %v910 = vld [vmem:[#allocation6 + $0x198] sm:$0xff]
    %v911 = vld [vmem:[#allocation6 + $0x1a0] sm:$0xff]
    %v912 = vld [vmem:[#allocation6 + $0x1a8] sm:$0xff]
    %v913 = vld [vmem:[#allocation6 + $0x1b0] sm:$0xff]
    %v914 = vld [vmem:[#allocation6 + $0x1b8] sm:$0xff]
    %v915 = vld [vmem:[#allocation6 + $0x1c0] sm:$0xff]
    %v916 = vld [vmem:[#allocation6 + $0x1c8] sm:$0xff]
    %v917 = vld [vmem:[#allocation6 + $0x1d0] sm:$0xff]
    %v918 = vld [vmem:[#allocation6 + $0x1d8] sm:$0xff]
    %v919 = vld [vmem:[#allocation6 + $0x1e0] sm:$0xff]
    %v920 = vld [vmem:[#allocation6 + $0x1e8] sm:$0xff]
    %v921 = vld [vmem:[#allocation6 + $0x1f0] sm:$0xff]
    %v922 = vld [vmem:[#allocation6 + $0x1f8] sm:$0xff]
    %v923 = vld [vmem:[#allocation6 + $0x200] sm:$0xff]
    %v924 = vld [vmem:[#allocation6 + $0x208] sm:$0xff]
    %v925 = vld [vmem:[#allocation6 + $0x210] sm:$0xff]
    %v926 = vld [vmem:[#allocation6 + $0x218] sm:$0xff]
    %v927 = vld [vmem:[#allocation6 + $0x220] sm:$0xff]
    %v928 = vld [vmem:[#allocation6 + $0x228] sm:$0xff]
    %v929 = vld [vmem:[#allocation6 + $0x230] sm:$0xff]
    %v930 = vld [vmem:[#allocation6 + $0x238] sm:$0xff]
    %v931 = vld [vmem:[#allocation6 + $0x240] sm:$0xff]
    %v932 = vld [vmem:[#allocation6 + $0x248] sm:$0xff]
    %v933 = vld [vmem:[#allocation6 + $0x250] sm:$0xff]
    %v934 = vld [vmem:[#allocation6 + $0x258] sm:$0xff]
    %v935 = vld [vmem:[#allocation6 + $0x260] sm:$0xff]
    %v936 = vld [vmem:[#allocation6 + $0x268] sm:$0xff]
    %v937 = vld [vmem:[#allocation6 + $0x270] sm:$0xff]
    %v938 = vld [vmem:[#allocation6 + $0x278] sm:$0xff]
    %v939 = vld [vmem:[#allocation6 + $0x280] sm:$0xff]
    %v940 = vld [vmem:[#allocation6 + $0x288] sm:$0xff]
    %v941 = vld [vmem:[#allocation6 + $0x290] sm:$0xff]
    %v942 = vld [vmem:[#allocation6 + $0x298] sm:$0xff]
    %v943 = vld [vmem:[#allocation6 + $0x2a0] sm:$0xff]
    %v944 = vld [vmem:[#allocation6 + $0x2a8] sm:$0xff]
    %v945 = vld [vmem:[#allocation6 + $0x2b0] sm:$0xff]
    %v946 = vld [vmem:[#allocation6 + $0x2b8] sm:$0xff]
    %v947 = vld [vmem:[#allocation6 + $0x2c0] sm:$0xff]
    %v948 = vld [vmem:[#allocation6 + $0x2c8] sm:$0xff]
    %v949 = vld [vmem:[#allocation6 + $0x2d0] sm:$0xff]
    %v950 = vld [vmem:[#allocation6 + $0x2d8] sm:$0xff]
    %v951 = vld [vmem:[#allocation6 + $0x2e0] sm:$0xff]
    %v952 = vld [vmem:[#allocation6 + $0x2e8] sm:$0xff]
    %v953 = vld [vmem:[#allocation6 + $0x2f0] sm:$0xff]
    %v954 = vld [vmem:[#allocation6 + $0x2f8] sm:$0xff]
    %v955 = vld [vmem:[#allocation6 + $0x300] sm:$0xff]
    %v956 = vld [vmem:[#allocation6 + $0x308] sm:$0xff]
    %v957 = vld [vmem:[#allocation6 + $0x310] sm:$0xff]
    %v958 = vld [vmem:[#allocation6 + $0x318] sm:$0xff]
    %v959 = vld [vmem:[#allocation6 + $0x320] sm:$0xff]
    %v960 = vld [vmem:[#allocation6 + $0x328] sm:$0xff]
    %v961 = vld [vmem:[#allocation6 + $0x330] sm:$0xff]
    %v962 = vld [vmem:[#allocation6 + $0x338] sm:$0xff]
    %v963 = vld [vmem:[#allocation6 + $0x340] sm:$0xff]
    %v964 = vld [vmem:[#allocation6 + $0x348] sm:$0xff]
    %v965 = vld [vmem:[#allocation6 + $0x350] sm:$0xff]
    %v966 = vld [vmem:[#allocation6 + $0x358] sm:$0xff]
    %v967 = vld [vmem:[#allocation6 + $0x360] sm:$0xff]
    %v968 = vld [vmem:[#allocation6 + $0x368] sm:$0xff]
    %v969 = vld [vmem:[#allocation6 + $0x370] sm:$0xff]
    %v970 = vld [vmem:[#allocation6 + $0x378] sm:$0xff]
    %v971 = vld [vmem:[#allocation6 + $0x380] sm:$0xff]
    %v972 = vld [vmem:[#allocation6 + $0x388] sm:$0xff]
    %v973 = vld [vmem:[#allocation6 + $0x390] sm:$0xff]
    %v974 = vld [vmem:[#allocation6 + $0x398] sm:$0xff]
    %v975 = vld [vmem:[#allocation6 + $0x3a0] sm:$0xff]
    %v976 = vld [vmem:[#allocation6 + $0x3a8] sm:$0xff]
    %v977 = vld [vmem:[#allocation6 + $0x3b0] sm:$0xff]
    %v978 = vld [vmem:[#allocation6 + $0x3b8] sm:$0xff]
    %v979 = vld [vmem:[#allocation6 + $0x3c0] sm:$0xff]
    %v980 = vld [vmem:[#allocation6 + $0x3c8] sm:$0xff]
    %v981 = vld [vmem:[#allocation6 + $0x3d0] sm:$0xff]
    %v982 = vld [vmem:[#allocation6 + $0x3d8] sm:$0xff]
    %v983 = vld [vmem:[#allocation6 + $0x3e0] sm:$0xff]
    %v984 = vld [vmem:[#allocation6 + $0x3e8] sm:$0xff]
    %v985 = vld [vmem:[#allocation6 + $0x3f0] sm:$0xff]
    %v986 = vld [vmem:[#allocation6 + $0x3f8] sm:$0xff]
    %v987 = vld [vmem:[%s6] sm:$0xf]
    %v989 = vlaneseq
    %v990 = vshrl.u32 %v989, 7
    %v991 = vsub.s32 0, %v990
    %v992 = vrot.slane %v987, %v991
    %v993 = vlaneseq
    %v994 = vshrl.u32 %v993, 7
    %v995 = vsub.s32 1, %v994
    %v996 = vrot.slane %v987, %v995
    %v997 = vlaneseq
    %v998 = vshrl.u32 %v997, 7
    %v999 = vsub.s32 2, %v998
    %v1000 = vrot.slane %v987, %v999
    %v1001 = vlaneseq
    %v1002 = vshrl.u32 %v1001, 7
    %v1003 = vsub.s32 3, %v1002
    %v1004 = vrot.slane %v987, %v1003
    %v1137 = vunpack.c.l.b16 %v859
    %v1138 = vunpack.c.h.b16 %v859
    %v1139 = vunpack.c.l.b16 %v860
    %v1140 = vunpack.c.h.b16 %v860
    %v1141 = vunpack.c.l.b16 %v861
    %v1142 = vunpack.c.h.b16 %v861
    %v1143 = vunpack.c.l.b16 %v862
    %v1144 = vunpack.c.h.b16 %v862
    %v1145 = vunpack.c.l.b16 %v863
    %v1146 = vunpack.c.h.b16 %v863
    %v1147 = vunpack.c.l.b16 %v864
    %v1148 = vunpack.c.h.b16 %v864
    %v1149 = vunpack.c.l.b16 %v865
    %v1150 = vunpack.c.h.b16 %v865
    %v1151 = vunpack.c.l.b16 %v866
    %v1152 = vunpack.c.h.b16 %v866
    %v1153 = vunpack.c.l.b16 %v867
    %v1154 = vunpack.c.h.b16 %v867
    %v1155 = vunpack.c.l.b16 %v868
    %v1156 = vunpack.c.h.b16 %v868
    %v1157 = vunpack.c.l.b16 %v869
    %v1158 = vunpack.c.h.b16 %v869
    %v1159 = vunpack.c.l.b16 %v870
    %v1160 = vunpack.c.h.b16 %v870
    %v1161 = vunpack.c.l.b16 %v871
    %v1162 = vunpack.c.h.b16 %v871
    %v1163 = vunpack.c.l.b16 %v872
    %v1164 = vunpack.c.h.b16 %v872
    %v1165 = vunpack.c.l.b16 %v873
    %v1166 = vunpack.c.h.b16 %v873
    %v1167 = vunpack.c.l.b16 %v874
    %v1168 = vunpack.c.h.b16 %v874
    %v1169 = vunpack.c.l.b16 %v875
    %v1170 = vunpack.c.h.b16 %v875
    %v1171 = vunpack.c.l.b16 %v876
    %v1172 = vunpack.c.h.b16 %v876
    %v1173 = vunpack.c.l.b16 %v877
    %v1174 = vunpack.c.h.b16 %v877
    %v1175 = vunpack.c.l.b16 %v878
    %v1176 = vunpack.c.h.b16 %v878
    %v1177 = vunpack.c.l.b16 %v879
    %v1178 = vunpack.c.h.b16 %v879
    %v1179 = vunpack.c.l.b16 %v880
    %v1180 = vunpack.c.h.b16 %v880
    %v1181 = vunpack.c.l.b16 %v881
    %v1182 = vunpack.c.h.b16 %v881
    %v1183 = vunpack.c.l.b16 %v882
    %v1184 = vunpack.c.h.b16 %v882
    %v1185 = vunpack.c.l.b16 %v883
    %v1186 = vunpack.c.h.b16 %v883
    %v1187 = vunpack.c.l.b16 %v884
    %v1188 = vunpack.c.h.b16 %v884
    %v1189 = vunpack.c.l.b16 %v885
    %v1190 = vunpack.c.h.b16 %v885
    %v1191 = vunpack.c.l.b16 %v886
    %v1192 = vunpack.c.h.b16 %v886
    %v1193 = vunpack.c.l.b16 %v887
    %v1194 = vunpack.c.h.b16 %v887
    %v1195 = vunpack.c.l.b16 %v888
    %v1196 = vunpack.c.h.b16 %v888
    %v1197 = vunpack.c.l.b16 %v889
    %v1198 = vunpack.c.h.b16 %v889
    %v1199 = vunpack.c.l.b16 %v890
    %v1200 = vunpack.c.h.b16 %v890
    %v1201 = vunpack.c.l.b16 %v891
    %v1202 = vunpack.c.h.b16 %v891
    %v1203 = vunpack.c.l.b16 %v892
    %v1204 = vunpack.c.h.b16 %v892
    %v1205 = vunpack.c.l.b16 %v893
    %v1206 = vunpack.c.h.b16 %v893
    %v1207 = vunpack.c.l.b16 %v894
    %v1208 = vunpack.c.h.b16 %v894
    %v1209 = vunpack.c.l.b16 %v895
    %v1210 = vunpack.c.h.b16 %v895
    %v1211 = vunpack.c.l.b16 %v896
    %v1212 = vunpack.c.h.b16 %v896
    %v1213 = vunpack.c.l.b16 %v897
    %v1214 = vunpack.c.h.b16 %v897
    %v1215 = vunpack.c.l.b16 %v898
    %v1216 = vunpack.c.h.b16 %v898
    %v1217 = vunpack.c.l.b16 %v899
    %v1218 = vunpack.c.h.b16 %v899
    %v1219 = vunpack.c.l.b16 %v900
    %v1220 = vunpack.c.h.b16 %v900
    %v1221 = vunpack.c.l.b16 %v901
    %v1222 = vunpack.c.h.b16 %v901
    %v1223 = vunpack.c.l.b16 %v902
    %v1224 = vunpack.c.h.b16 %v902
    %v1225 = vunpack.c.l.b16 %v903
    %v1226 = vunpack.c.h.b16 %v903
    %v1227 = vunpack.c.l.b16 %v904
    %v1228 = vunpack.c.h.b16 %v904
    %v1229 = vunpack.c.l.b16 %v905
    %v1230 = vunpack.c.h.b16 %v905
    %v1231 = vunpack.c.l.b16 %v906
    %v1232 = vunpack.c.h.b16 %v906
    %v1233 = vunpack.c.l.b16 %v907
    %v1234 = vunpack.c.h.b16 %v907
    %v1235 = vunpack.c.l.b16 %v908
    %v1236 = vunpack.c.h.b16 %v908
    %v1237 = vunpack.c.l.b16 %v909
    %v1238 = vunpack.c.h.b16 %v909
    %v1239 = vunpack.c.l.b16 %v910
    %v1240 = vunpack.c.h.b16 %v910
    %v1241 = vunpack.c.l.b16 %v911
    %v1242 = vunpack.c.h.b16 %v911
    %v1243 = vunpack.c.l.b16 %v912
    %v1244 = vunpack.c.h.b16 %v912
    %v1245 = vunpack.c.l.b16 %v913
    %v1246 = vunpack.c.h.b16 %v913
    %v1247 = vunpack.c.l.b16 %v914
    %v1248 = vunpack.c.h.b16 %v914
    %v1249 = vunpack.c.l.b16 %v915
    %v1250 = vunpack.c.h.b16 %v915
    %v1251 = vunpack.c.l.b16 %v916
    %v1252 = vunpack.c.h.b16 %v916
    %v1253 = vunpack.c.l.b16 %v917
    %v1254 = vunpack.c.h.b16 %v917
    %v1255 = vunpack.c.l.b16 %v918
    %v1256 = vunpack.c.h.b16 %v918
    %v1257 = vunpack.c.l.b16 %v919
    %v1258 = vunpack.c.h.b16 %v919
    %v1259 = vunpack.c.l.b16 %v920
    %v1260 = vunpack.c.h.b16 %v920
    %v1261 = vunpack.c.l.b16 %v921
    %v1262 = vunpack.c.h.b16 %v921
    %v1263 = vunpack.c.l.b16 %v922
    %v1264 = vunpack.c.h.b16 %v922
    %v1265 = vunpack.c.l.b16 %v923
    %v1266 = vunpack.c.h.b16 %v923
    %v1267 = vunpack.c.l.b16 %v924
    %v1268 = vunpack.c.h.b16 %v924
    %v1269 = vunpack.c.l.b16 %v925
    %v1270 = vunpack.c.h.b16 %v925
    %v1271 = vunpack.c.l.b16 %v926
    %v1272 = vunpack.c.h.b16 %v926
    %v1273 = vunpack.c.l.b16 %v927
    %v1274 = vunpack.c.h.b16 %v927
    %v1275 = vunpack.c.l.b16 %v928
    %v1276 = vunpack.c.h.b16 %v928
    %v1277 = vunpack.c.l.b16 %v929
    %v1278 = vunpack.c.h.b16 %v929
    %v1279 = vunpack.c.l.b16 %v930
    %v1280 = vunpack.c.h.b16 %v930
    %v1281 = vunpack.c.l.b16 %v931
    %v1282 = vunpack.c.h.b16 %v931
    %v1283 = vunpack.c.l.b16 %v932
    %v1284 = vunpack.c.h.b16 %v932
    %v1285 = vunpack.c.l.b16 %v933
    %v1286 = vunpack.c.h.b16 %v933
    %v1287 = vunpack.c.l.b16 %v934
    %v1288 = vunpack.c.h.b16 %v934
    %v1289 = vunpack.c.l.b16 %v935
    %v1290 = vunpack.c.h.b16 %v935
    %v1291 = vunpack.c.l.b16 %v936
    %v1292 = vunpack.c.h.b16 %v936
    %v1293 = vunpack.c.l.b16 %v937
    %v1294 = vunpack.c.h.b16 %v937
    %v1295 = vunpack.c.l.b16 %v938
    %v1296 = vunpack.c.h.b16 %v938
    %v1297 = vunpack.c.l.b16 %v939
    %v1298 = vunpack.c.h.b16 %v939
    %v1299 = vunpack.c.l.b16 %v940
    %v1300 = vunpack.c.h.b16 %v940
    %v1301 = vunpack.c.l.b16 %v941
    %v1302 = vunpack.c.h.b16 %v941
    %v1303 = vunpack.c.l.b16 %v942
    %v1304 = vunpack.c.h.b16 %v942
    %v1305 = vunpack.c.l.b16 %v943
    %v1306 = vunpack.c.h.b16 %v943
    %v1307 = vunpack.c.l.b16 %v944
    %v1308 = vunpack.c.h.b16 %v944
    %v1309 = vunpack.c.l.b16 %v945
    %v1310 = vunpack.c.h.b16 %v945
    %v1311 = vunpack.c.l.b16 %v946
    %v1312 = vunpack.c.h.b16 %v946
    %v1313 = vunpack.c.l.b16 %v947
    %v1314 = vunpack.c.h.b16 %v947
    %v1315 = vunpack.c.l.b16 %v948
    %v1316 = vunpack.c.h.b16 %v948
    %v1317 = vunpack.c.l.b16 %v949
    %v1318 = vunpack.c.h.b16 %v949
    %v1319 = vunpack.c.l.b16 %v950
    %v1320 = vunpack.c.h.b16 %v950
    %v1321 = vunpack.c.l.b16 %v951
    %v1322 = vunpack.c.h.b16 %v951
    %v1323 = vunpack.c.l.b16 %v952
    %v1324 = vunpack.c.h.b16 %v952
    %v1325 = vunpack.c.l.b16 %v953
    %v1326 = vunpack.c.h.b16 %v953
    %v1327 = vunpack.c.l.b16 %v954
    %v1328 = vunpack.c.h.b16 %v954
    %v1329 = vunpack.c.l.b16 %v955
    %v1330 = vunpack.c.h.b16 %v955
    %v1331 = vunpack.c.l.b16 %v956
    %v1332 = vunpack.c.h.b16 %v956
    %v1333 = vunpack.c.l.b16 %v957
    %v1334 = vunpack.c.h.b16 %v957
    %v1335 = vunpack.c.l.b16 %v958
    %v1336 = vunpack.c.h.b16 %v958
    %v1337 = vunpack.c.l.b16 %v959
    %v1338 = vunpack.c.h.b16 %v959
    %v1339 = vunpack.c.l.b16 %v960
    %v1340 = vunpack.c.h.b16 %v960
    %v1341 = vunpack.c.l.b16 %v961
    %v1342 = vunpack.c.h.b16 %v961
    %v1343 = vunpack.c.l.b16 %v962
    %v1344 = vunpack.c.h.b16 %v962
    %v1345 = vunpack.c.l.b16 %v963
    %v1346 = vunpack.c.h.b16 %v963
    %v1347 = vunpack.c.l.b16 %v964
    %v1348 = vunpack.c.h.b16 %v964
    %v1349 = vunpack.c.l.b16 %v965
    %v1350 = vunpack.c.h.b16 %v965
    %v1351 = vunpack.c.l.b16 %v966
    %v1352 = vunpack.c.h.b16 %v966
    %v1353 = vunpack.c.l.b16 %v967
    %v1354 = vunpack.c.h.b16 %v967
    %v1355 = vunpack.c.l.b16 %v968
    %v1356 = vunpack.c.h.b16 %v968
    %v1357 = vunpack.c.l.b16 %v969
    %v1358 = vunpack.c.h.b16 %v969
    %v1359 = vunpack.c.l.b16 %v970
    %v1360 = vunpack.c.h.b16 %v970
    %v1361 = vunpack.c.l.b16 %v971
    %v1362 = vunpack.c.h.b16 %v971
    %v1363 = vunpack.c.l.b16 %v972
    %v1364 = vunpack.c.h.b16 %v972
    %v1365 = vunpack.c.l.b16 %v973
    %v1366 = vunpack.c.h.b16 %v973
    %v1367 = vunpack.c.l.b16 %v974
    %v1368 = vunpack.c.h.b16 %v974
    %v1369 = vunpack.c.l.b16 %v975
    %v1370 = vunpack.c.h.b16 %v975
    %v1371 = vunpack.c.l.b16 %v976
    %v1372 = vunpack.c.h.b16 %v976
    %v1373 = vunpack.c.l.b16 %v977
    %v1374 = vunpack.c.h.b16 %v977
    %v1375 = vunpack.c.l.b16 %v978
    %v1376 = vunpack.c.h.b16 %v978
    %v1377 = vunpack.c.l.b16 %v979
    %v1378 = vunpack.c.h.b16 %v979
    %v1379 = vunpack.c.l.b16 %v980
    %v1380 = vunpack.c.h.b16 %v980
    %v1381 = vunpack.c.l.b16 %v981
    %v1382 = vunpack.c.h.b16 %v981
    %v1383 = vunpack.c.l.b16 %v982
    %v1384 = vunpack.c.h.b16 %v982
    %v1385 = vunpack.c.l.b16 %v983
    %v1386 = vunpack.c.h.b16 %v983
    %v1387 = vunpack.c.l.b16 %v984
    %v1388 = vunpack.c.h.b16 %v984
    %v1389 = vunpack.c.l.b16 %v985
    %v1390 = vunpack.c.h.b16 %v985
    %v1391 = vunpack.c.l.b16 %v986
    %v1392 = vunpack.c.h.b16 %v986
    %v1393 = vpack.c.b16 %v1141, %v1137
    %v1394 = vpack.c.b16 %v1142, %v1138
    %v1395 = vpack.c.b16 %v1143, %v1139
    %v1396 = vpack.c.b16 %v1144, %v1140
    %v1397 = vpack.c.b16 %v1149, %v1145
    %v1398 = vpack.c.b16 %v1150, %v1146
    %v1399 = vpack.c.b16 %v1151, %v1147
    %v1400 = vpack.c.b16 %v1152, %v1148
    %v1401 = vpack.c.b16 %v1157, %v1153
    %v1402 = vpack.c.b16 %v1158, %v1154
    %v1403 = vpack.c.b16 %v1159, %v1155
    %v1404 = vpack.c.b16 %v1160, %v1156
    %v1405 = vpack.c.b16 %v1165, %v1161
    %v1406 = vpack.c.b16 %v1166, %v1162
    %v1407 = vpack.c.b16 %v1167, %v1163
    %v1408 = vpack.c.b16 %v1168, %v1164
    %v1409 = vpack.c.b16 %v1173, %v1169
    %v1410 = vpack.c.b16 %v1174, %v1170
    %v1411 = vpack.c.b16 %v1175, %v1171
    %v1412 = vpack.c.b16 %v1176, %v1172
    %v1413 = vpack.c.b16 %v1181, %v1177
    %v1414 = vpack.c.b16 %v1182, %v1178
    %v1415 = vpack.c.b16 %v1183, %v1179
    %v1416 = vpack.c.b16 %v1184, %v1180
    %v1417 = vpack.c.b16 %v1189, %v1185
    %v1418 = vpack.c.b16 %v1190, %v1186
    %v1419 = vpack.c.b16 %v1191, %v1187
    %v1420 = vpack.c.b16 %v1192, %v1188
    %v1421 = vpack.c.b16 %v1197, %v1193
    %v1422 = vpack.c.b16 %v1198, %v1194
    %v1423 = vpack.c.b16 %v1199, %v1195
    %v1424 = vpack.c.b16 %v1200, %v1196
    %v1425 = vpack.c.b16 %v1205, %v1201
    %v1426 = vpack.c.b16 %v1206, %v1202
    %v1427 = vpack.c.b16 %v1207, %v1203
    %v1428 = vpack.c.b16 %v1208, %v1204
    %v1429 = vpack.c.b16 %v1213, %v1209
    %v1430 = vpack.c.b16 %v1214, %v1210
    %v1431 = vpack.c.b16 %v1215, %v1211
    %v1432 = vpack.c.b16 %v1216, %v1212
    %v1433 = vpack.c.b16 %v1221, %v1217
    %v1434 = vpack.c.b16 %v1222, %v1218
    %v1435 = vpack.c.b16 %v1223, %v1219
    %v1436 = vpack.c.b16 %v1224, %v1220
    %v1437 = vpack.c.b16 %v1229, %v1225
    %v1438 = vpack.c.b16 %v1230, %v1226
    %v1439 = vpack.c.b16 %v1231, %v1227
    %v1440 = vpack.c.b16 %v1232, %v1228
    %v1441 = vpack.c.b16 %v1237, %v1233
    %v1442 = vpack.c.b16 %v1238, %v1234
    %v1443 = vpack.c.b16 %v1239, %v1235
    %v1444 = vpack.c.b16 %v1240, %v1236
    %v1445 = vpack.c.b16 %v1245, %v1241
    %v1446 = vpack.c.b16 %v1246, %v1242
    %v1447 = vpack.c.b16 %v1247, %v1243
    %v1448 = vpack.c.b16 %v1248, %v1244
    %v1449 = vpack.c.b16 %v1253, %v1249
    %v1450 = vpack.c.b16 %v1254, %v1250
    %v1451 = vpack.c.b16 %v1255, %v1251
    %v1452 = vpack.c.b16 %v1256, %v1252
    %v1453 = vpack.c.b16 %v1261, %v1257
    %v1454 = vpack.c.b16 %v1262, %v1258
    %v1455 = vpack.c.b16 %v1263, %v1259
    %v1456 = vpack.c.b16 %v1264, %v1260
    %v1457 = vpack.c.b16 %v1269, %v1265
    %v1458 = vpack.c.b16 %v1270, %v1266
    %v1459 = vpack.c.b16 %v1271, %v1267
    %v1460 = vpack.c.b16 %v1272, %v1268
    %v1461 = vpack.c.b16 %v1277, %v1273
    %v1462 = vpack.c.b16 %v1278, %v1274
    %v1463 = vpack.c.b16 %v1279, %v1275
    %v1464 = vpack.c.b16 %v1280, %v1276
    %v1465 = vpack.c.b16 %v1285, %v1281
    %v1466 = vpack.c.b16 %v1286, %v1282
    %v1467 = vpack.c.b16 %v1287, %v1283
    %v1468 = vpack.c.b16 %v1288, %v1284
    %v1469 = vpack.c.b16 %v1293, %v1289
    %v1470 = vpack.c.b16 %v1294, %v1290
    %v1471 = vpack.c.b16 %v1295, %v1291
    %v1472 = vpack.c.b16 %v1296, %v1292
    %v1473 = vpack.c.b16 %v1301, %v1297
    %v1474 = vpack.c.b16 %v1302, %v1298
    %v1475 = vpack.c.b16 %v1303, %v1299
    %v1476 = vpack.c.b16 %v1304, %v1300
    %v1477 = vpack.c.b16 %v1309, %v1305
    %v1478 = vpack.c.b16 %v1310, %v1306
    %v1479 = vpack.c.b16 %v1311, %v1307
    %v1480 = vpack.c.b16 %v1312, %v1308
    %v1481 = vpack.c.b16 %v1317, %v1313
    %v1482 = vpack.c.b16 %v1318, %v1314
    %v1483 = vpack.c.b16 %v1319, %v1315
    %v1484 = vpack.c.b16 %v1320, %v1316
    %v1485 = vpack.c.b16 %v1325, %v1321
    %v1486 = vpack.c.b16 %v1326, %v1322
    %v1487 = vpack.c.b16 %v1327, %v1323
    %v1488 = vpack.c.b16 %v1328, %v1324
    %v1489 = vpack.c.b16 %v1333, %v1329
    %v1490 = vpack.c.b16 %v1334, %v1330
    %v1491 = vpack.c.b16 %v1335, %v1331
    %v1492 = vpack.c.b16 %v1336, %v1332
    %v1493 = vpack.c.b16 %v1341, %v1337
    %v1494 = vpack.c.b16 %v1342, %v1338
    %v1495 = vpack.c.b16 %v1343, %v1339
    %v1496 = vpack.c.b16 %v1344, %v1340
    %v1497 = vpack.c.b16 %v1349, %v1345
    %v1498 = vpack.c.b16 %v1350, %v1346
    %v1499 = vpack.c.b16 %v1351, %v1347
    %v1500 = vpack.c.b16 %v1352, %v1348
    %v1501 = vpack.c.b16 %v1357, %v1353
    %v1502 = vpack.c.b16 %v1358, %v1354
    %v1503 = vpack.c.b16 %v1359, %v1355
    %v1504 = vpack.c.b16 %v1360, %v1356
    %v1505 = vpack.c.b16 %v1365, %v1361
    %v1506 = vpack.c.b16 %v1366, %v1362
    %v1507 = vpack.c.b16 %v1367, %v1363
    %v1508 = vpack.c.b16 %v1368, %v1364
    %v1509 = vpack.c.b16 %v1373, %v1369
    %v1510 = vpack.c.b16 %v1374, %v1370
    %v1511 = vpack.c.b16 %v1375, %v1371
    %v1512 = vpack.c.b16 %v1376, %v1372
    %v1513 = vpack.c.b16 %v1381, %v1377
    %v1514 = vpack.c.b16 %v1382, %v1378
    %v1515 = vpack.c.b16 %v1383, %v1379
    %v1516 = vpack.c.b16 %v1384, %v1380
    %v1517 = vpack.c.b16 %v1389, %v1385
    %v1518 = vpack.c.b16 %v1390, %v1386
    %v1519 = vpack.c.b16 %v1391, %v1387
    %v1520 = vpack.c.b16 %v1392, %v1388
    %1649 = vmatprep.subr.bf16.mxu0 %v1422
    %1650 = vmatpush1.bf16.msra.mxu0 %v1421
    %1651 = vmatprep.subr.bf16.mxu0 %v1418
    %1652 = vmatpush1.bf16.msra.mxu0 %v1417
    %1653 = vmatprep.subr.bf16.mxu0 %v1414
    %1654 = vmatpush1.bf16.msra.mxu0 %v1413
    %1655 = vmatprep.subr.bf16.mxu0 %v1410
    %1656 = vmatpush1.bf16.msra.mxu0 %v1409
    %1657 = vmatprep.subr.bf16.mxu0 %v1406
    %1658 = vmatpush1.bf16.msra.mxu0 %v1405
    %1659 = vmatprep.subr.bf16.mxu0 %v1402
    %1660 = vmatpush1.bf16.msra.mxu0 %v1401
    %1661 = vmatprep.subr.bf16.mxu0 %v1398
    %1662 = vmatpush1.bf16.msra.mxu0 %v1397
    %1663 = vmatprep.subr.bf16.mxu0 %v1394
    %1664 = vmatpush1.bf16.msra.mxu0 %v1393
    %1665 = vmatprep.subr.bf16.mxu0 %v1454
    %1666 = vmatpush2.bf16.msra.mxu0 %v1453
    %1667 = vmatprep.subr.bf16.mxu0 %v1450
    %1668 = vmatpush2.bf16.msra.mxu0 %v1449
    %1669 = vmatprep.subr.bf16.mxu0 %v1446
    %1670 = vmatpush2.bf16.msra.mxu0 %v1445
    %1671 = vmatprep.subr.bf16.mxu0 %v1442
    %1672 = vmatpush2.bf16.msra.mxu0 %v1441
    %1673 = vmatprep.subr.bf16.mxu0 %v1438
    %1674 = vmatpush2.bf16.msra.mxu0 %v1437
    %1675 = vmatprep.subr.bf16.mxu0 %v1434
    %1676 = vmatpush2.bf16.msra.mxu0 %v1433
    %1677 = vmatprep.subr.bf16.mxu0 %v1430
    %1678 = vmatpush2.bf16.msra.mxu0 %v1429
    %1679 = vmatprep.subr.bf16.mxu0 %v1426
    %1680 = vmatpush2.bf16.msra.mxu0 %v1425
    %1681 = vmatprep.mubr.bf16.mxu0 %v854
    %1682 = vmatmul.mubr.bf16.gmra.mxu0 %v852
    %v1683 = vpop.f32.mrf.mxu0
    %v1684 = vadd.f32 %v992, %v1683
    %v1685 = vpop.f32.mrf.mxu0
    %v1686 = vadd.f32 %v996, %v1685
    %v1687 = vpop.f32.mrf.mxu0
    %v1688 = vpop.f32.mrf.mxu0
    %1689 = vdwg.mxu0
    %1690 = vmatprep.subr.bf16.mxu0 %v1486
    %1691 = vmatpush1.bf16.msra.mxu0 %v1485
    %1692 = vmatprep.subr.bf16.mxu0 %v1482
    %1693 = vmatpush1.bf16.msra.mxu0 %v1481
    %1694 = vmatprep.subr.bf16.mxu0 %v1478
    %1695 = vmatpush1.bf16.msra.mxu0 %v1477
    %1696 = vmatprep.subr.bf16.mxu0 %v1474
    %1697 = vmatpush1.bf16.msra.mxu0 %v1473
    %1698 = vmatprep.subr.bf16.mxu0 %v1470
    %1699 = vmatpush1.bf16.msra.mxu0 %v1469
    %1700 = vmatprep.subr.bf16.mxu0 %v1466
    %1701 = vmatpush1.bf16.msra.mxu0 %v1465
    %1702 = vmatprep.subr.bf16.mxu0 %v1462
    %1703 = vmatpush1.bf16.msra.mxu0 %v1461
    %1704 = vmatprep.subr.bf16.mxu0 %v1458
    %1705 = vmatpush1.bf16.msra.mxu0 %v1457
    %1706 = vmatprep.subr.bf16.mxu0 %v1518
    %1707 = vmatpush2.bf16.msra.mxu0 %v1517
    %1708 = vmatprep.subr.bf16.mxu0 %v1514
    %1709 = vmatpush2.bf16.msra.mxu0 %v1513
    %1710 = vmatprep.subr.bf16.mxu0 %v1510
    %1711 = vmatpush2.bf16.msra.mxu0 %v1509
    %1712 = vmatprep.subr.bf16.mxu0 %v1506
    %1713 = vmatpush2.bf16.msra.mxu0 %v1505
    %1714 = vmatprep.subr.bf16.mxu0 %v1502
    %1715 = vmatpush2.bf16.msra.mxu0 %v1501
    %1716 = vmatprep.subr.bf16.mxu0 %v1498
    %1717 = vmatpush2.bf16.msra.mxu0 %v1497
    %1718 = vmatprep.subr.bf16.mxu0 %v1494
    %1719 = vmatpush2.bf16.msra.mxu0 %v1493
    %1720 = vmatprep.subr.bf16.mxu0 %v1490
    %1721 = vmatpush2.bf16.msra.mxu0 %v1489
    %1722 = vmatprep.mubr.bf16.mxu0 %v858
    %1723 = vmatmul.mubr.bf16.gmra.mxu0 %v856
    %v1724 = vpop.f32.mrf.mxu0
    %v1725 = vadd.f32 %v1684, %v1724
    %v1726 = vpop.f32.mrf.mxu0
    %v1727 = vadd.f32 %v1686, %v1726
    %v1728 = vpop.f32.mrf.mxu0
    %v1729 = vpop.f32.mrf.mxu0
    %1730 = vdwg.mxu0
    %1731 = vmatprep.subr.bf16.mxu0 %v1424
    %1732 = vmatpush1.bf16.msra.mxu0 %v1423
    %1733 = vmatprep.subr.bf16.mxu0 %v1420
    %1734 = vmatpush1.bf16.msra.mxu0 %v1419
    %1735 = vmatprep.subr.bf16.mxu0 %v1416
    %1736 = vmatpush1.bf16.msra.mxu0 %v1415
    %1737 = vmatprep.subr.bf16.mxu0 %v1412
    %1738 = vmatpush1.bf16.msra.mxu0 %v1411
    %1739 = vmatprep.subr.bf16.mxu0 %v1408
    %1740 = vmatpush1.bf16.msra.mxu0 %v1407
    %1741 = vmatprep.subr.bf16.mxu0 %v1404
    %1742 = vmatpush1.bf16.msra.mxu0 %v1403
    %1743 = vmatprep.subr.bf16.mxu0 %v1400
    %1744 = vmatpush1.bf16.msra.mxu0 %v1399
    %1745 = vmatprep.subr.bf16.mxu0 %v1396
    %1746 = vmatpush1.bf16.msra.mxu0 %v1395
    %1747 = vmatprep.subr.bf16.mxu0 %v1456
    %1748 = vmatpush2.bf16.msra.mxu0 %v1455
    %1749 = vmatprep.subr.bf16.mxu0 %v1452
    %1750 = vmatpush2.bf16.msra.mxu0 %v1451
    %1751 = vmatprep.subr.bf16.mxu0 %v1448
    %1752 = vmatpush2.bf16.msra.mxu0 %v1447
    %1753 = vmatprep.subr.bf16.mxu0 %v1444
    %1754 = vmatpush2.bf16.msra.mxu0 %v1443
    %1755 = vmatprep.subr.bf16.mxu0 %v1440
    %1756 = vmatpush2.bf16.msra.mxu0 %v1439
    %1757 = vmatprep.subr.bf16.mxu0 %v1436
    %1758 = vmatpush2.bf16.msra.mxu0 %v1435
    %1759 = vmatprep.subr.bf16.mxu0 %v1432
    %1760 = vmatpush2.bf16.msra.mxu0 %v1431
    %1761 = vmatprep.subr.bf16.mxu0 %v1428
    %1762 = vmatpush2.bf16.msra.mxu0 %v1427
    %1763 = vmatprep.mubr.bf16.mxu0 %v854
    %1764 = vmatmul.mubr.bf16.gmra.mxu0 %v852
    %v1765 = vpop.f32.mrf.mxu0
    %v1766 = vadd.f32 %v1000, %v1765
    %v1767 = vpop.f32.mrf.mxu0
    %v1768 = vadd.f32 %v1004, %v1767
    %v1769 = vpop.f32.mrf.mxu0
    %v1770 = vpop.f32.mrf.mxu0
    %1771 = vdwg.mxu0
    %1772 = vmatprep.subr.bf16.mxu0 %v1488
    %1773 = vmatpush1.bf16.msra.mxu0 %v1487
    %1774 = vmatprep.subr.bf16.mxu0 %v1484
    %1775 = vmatpush1.bf16.msra.mxu0 %v1483
    %1776 = vmatprep.subr.bf16.mxu0 %v1480
    %1777 = vmatpush1.bf16.msra.mxu0 %v1479
    %1778 = vmatprep.subr.bf16.mxu0 %v1476
    %1779 = vmatpush1.bf16.msra.mxu0 %v1475
    %1780 = vmatprep.subr.bf16.mxu0 %v1472
    %1781 = vmatpush1.bf16.msra.mxu0 %v1471
    %1782 = vmatprep.subr.bf16.mxu0 %v1468
    %1783 = vmatpush1.bf16.msra.mxu0 %v1467
    %1784 = vmatprep.subr.bf16.mxu0 %v1464
    %1785 = vmatpush1.bf16.msra.mxu0 %v1463
    %1786 = vmatprep.subr.bf16.mxu0 %v1460
    %1787 = vmatpush1.bf16.msra.mxu0 %v1459
    %1788 = vmatprep.subr.bf16.mxu0 %v1520
    %1789 = vmatpush2.bf16.msra.mxu0 %v1519
    %1790 = vmatprep.subr.bf16.mxu0 %v1516
    %1791 = vmatpush2.bf16.msra.mxu0 %v1515
    %1792 = vmatprep.subr.bf16.mxu0 %v1512
    %1793 = vmatpush2.bf16.msra.mxu0 %v1511
    %1794 = vmatprep.subr.bf16.mxu0 %v1508
    %1795 = vmatpush2.bf16.msra.mxu0 %v1507
    %1796 = vmatprep.subr.bf16.mxu0 %v1504
    %1797 = vmatpush2.bf16.msra.mxu0 %v1503
    %1798 = vmatprep.subr.bf16.mxu0 %v1500
    %1799 = vmatpush2.bf16.msra.mxu0 %v1499
    %1800 = vmatprep.subr.bf16.mxu0 %v1496
    %1801 = vmatpush2.bf16.msra.mxu0 %v1495
    %1802 = vmatprep.subr.bf16.mxu0 %v1492
    %1803 = vmatpush2.bf16.msra.mxu0 %v1491
    %1804 = vmatprep.mubr.bf16.mxu0 %v858
    %1805 = vmatmul.mubr.bf16.gmra.mxu0 %v856
    %v1806 = vpop.f32.mrf.mxu0
    %v1807 = vadd.f32 %v1766, %v1806
    %v1808 = vpop.f32.mrf.mxu0
    %v1809 = vadd.f32 %v1768, %v1808
    %v1810 = vpop.f32.mrf.mxu0
    %v1811 = vpop.f32.mrf.mxu0
    %1812 = vdwg.mxu0
    %v1813 = vpack.c.bf16 %v1725, %v1725
    %v1814 = vpack.c.bf16 %v1727, %v1727
    %v1815 = vpack.c.bf16 %v1807, %v1807
    %v1816 = vpack.c.bf16 %v1809, %v1809
    %v1817 = vxor.u32 %v1813, 2147516416
    %v1818 = vxor.u32 %v1814, 2147516416
    %v1819 = vxor.u32 %v1815, 2147516416
    %v1820 = vxor.u32 %v1816, 2147516416
    %v1822 = vmul.bf16 %v1817, 1069105081
    %v1823 = vpow.bf16.pop %v1822
    %v1825 = vmul.bf16 %v1818, 1069105081
    %v1826 = vpow.bf16.pop %v1825
    %v1828 = vmul.bf16 %v1819, 1069105081
    %v1829 = vpow.bf16.pop %v1828
    %v1831 = vmul.bf16 %v1820, 1069105081
    %v1832 = vpow.bf16.pop %v1831
    %v1833 = vadd.bf16 %v1823, 1065369472
    %v1834 = vadd.bf16 %v1826, 1065369472
    %v1835 = vadd.bf16 %v1829, 1065369472
    %v1836 = vadd.bf16 %v1832, 1065369472
    %v1837 = vrcp.bf16.pop %v1833
    %v1838 = vmul.bf16 1065369472, %v1837
    %v1839 = vrcp.bf16.pop %v1834
    %v1840 = vmul.bf16 1065369472, %v1839
    %v1841 = vrcp.bf16.pop %v1835
    %v1842 = vmul.bf16 1065369472, %v1841
    %v1843 = vrcp.bf16.pop %v1836
    %v1844 = vmul.bf16 1065369472, %v1843
    %v1845 = vld [vmem:[#allocation7] sm:$0xff]
    %v1846 = vld [vmem:[#allocation7 + $0x8] sm:$0xff]
    %v1847 = vld [vmem:[#allocation7 + $0x10] sm:$0xff]
    %v1848 = vld [vmem:[#allocation7 + $0x18] sm:$0xff]
    %v1849 = vld [vmem:[#allocation7 + $0x20] sm:$0xff]
    %v1850 = vld [vmem:[#allocation7 + $0x28] sm:$0xff]
    %v1851 = vld [vmem:[#allocation7 + $0x30] sm:$0xff]
    %v1852 = vld [vmem:[#allocation7 + $0x38] sm:$0xff]
    %v1853 = vld [vmem:[#allocation7 + $0x40] sm:$0xff]
    %v1854 = vld [vmem:[#allocation7 + $0x48] sm:$0xff]
    %v1855 = vld [vmem:[#allocation7 + $0x50] sm:$0xff]
    %v1856 = vld [vmem:[#allocation7 + $0x58] sm:$0xff]
    %v1857 = vld [vmem:[#allocation7 + $0x60] sm:$0xff]
    %v1858 = vld [vmem:[#allocation7 + $0x68] sm:$0xff]
    %v1859 = vld [vmem:[#allocation7 + $0x70] sm:$0xff]
    %v1860 = vld [vmem:[#allocation7 + $0x78] sm:$0xff]
    %v1861 = vld [vmem:[#allocation7 + $0x80] sm:$0xff]
    %v1862 = vld [vmem:[#allocation7 + $0x88] sm:$0xff]
    %v1863 = vld [vmem:[#allocation7 + $0x90] sm:$0xff]
    %v1864 = vld [vmem:[#allocation7 + $0x98] sm:$0xff]
    %v1865 = vld [vmem:[#allocation7 + $0xa0] sm:$0xff]
    %v1866 = vld [vmem:[#allocation7 + $0xa8] sm:$0xff]
    %v1867 = vld [vmem:[#allocation7 + $0xb0] sm:$0xff]
    %v1868 = vld [vmem:[#allocation7 + $0xb8] sm:$0xff]
    %v1869 = vld [vmem:[#allocation7 + $0xc0] sm:$0xff]
    %v1870 = vld [vmem:[#allocation7 + $0xc8] sm:$0xff]
    %v1871 = vld [vmem:[#allocation7 + $0xd0] sm:$0xff]
    %v1872 = vld [vmem:[#allocation7 + $0xd8] sm:$0xff]
    %v1873 = vld [vmem:[#allocation7 + $0xe0] sm:$0xff]
    %v1874 = vld [vmem:[#allocation7 + $0xe8] sm:$0xff]
    %v1875 = vld [vmem:[#allocation7 + $0xf0] sm:$0xff]
    %v1876 = vld [vmem:[#allocation7 + $0xf8] sm:$0xff]
    %v1877 = vld [vmem:[#allocation7 + $0x100] sm:$0xff]
    %v1878 = vld [vmem:[#allocation7 + $0x108] sm:$0xff]
    %v1879 = vld [vmem:[#allocation7 + $0x110] sm:$0xff]
    %v1880 = vld [vmem:[#allocation7 + $0x118] sm:$0xff]
    %v1881 = vld [vmem:[#allocation7 + $0x120] sm:$0xff]
    %v1882 = vld [vmem:[#allocation7 + $0x128] sm:$0xff]
    %v1883 = vld [vmem:[#allocation7 + $0x130] sm:$0xff]
    %v1884 = vld [vmem:[#allocation7 + $0x138] sm:$0xff]
    %v1885 = vld [vmem:[#allocation7 + $0x140] sm:$0xff]
    %v1886 = vld [vmem:[#allocation7 + $0x148] sm:$0xff]
    %v1887 = vld [vmem:[#allocation7 + $0x150] sm:$0xff]
    %v1888 = vld [vmem:[#allocation7 + $0x158] sm:$0xff]
    %v1889 = vld [vmem:[#allocation7 + $0x160] sm:$0xff]
    %v1890 = vld [vmem:[#allocation7 + $0x168] sm:$0xff]
    %v1891 = vld [vmem:[#allocation7 + $0x170] sm:$0xff]
    %v1892 = vld [vmem:[#allocation7 + $0x178] sm:$0xff]
    %v1893 = vld [vmem:[#allocation7 + $0x180] sm:$0xff]
    %v1894 = vld [vmem:[#allocation7 + $0x188] sm:$0xff]
    %v1895 = vld [vmem:[#allocation7 + $0x190] sm:$0xff]
    %v1896 = vld [vmem:[#allocation7 + $0x198] sm:$0xff]
    %v1897 = vld [vmem:[#allocation7 + $0x1a0] sm:$0xff]
    %v1898 = vld [vmem:[#allocation7 + $0x1a8] sm:$0xff]
    %v1899 = vld [vmem:[#allocation7 + $0x1b0] sm:$0xff]
    %v1900 = vld [vmem:[#allocation7 + $0x1b8] sm:$0xff]
    %v1901 = vld [vmem:[#allocation7 + $0x1c0] sm:$0xff]
    %v1902 = vld [vmem:[#allocation7 + $0x1c8] sm:$0xff]
    %v1903 = vld [vmem:[#allocation7 + $0x1d0] sm:$0xff]
    %v1904 = vld [vmem:[#allocation7 + $0x1d8] sm:$0xff]
    %v1905 = vld [vmem:[#allocation7 + $0x1e0] sm:$0xff]
    %v1906 = vld [vmem:[#allocation7 + $0x1e8] sm:$0xff]
    %v1907 = vld [vmem:[#allocation7 + $0x1f0] sm:$0xff]
    %v1908 = vld [vmem:[#allocation7 + $0x1f8] sm:$0xff]
    %v1909 = vld [vmem:[#allocation9] sm:$0x3]
    %v1911 = vlaneseq
    %v1912 = vshrl.u32 %v1911, 7
    %v1913 = vsub.s32 0, %v1912
    %v1914 = vrot.slane %v1909, %v1913
    %v1915 = vlaneseq
    %v1916 = vshrl.u32 %v1915, 7
    %v1917 = vsub.s32 1, %v1916
    %v1918 = vrot.slane %v1909, %v1917
    %v1985 = vunpack.c.l.b16 %v1845
    %v1986 = vunpack.c.h.b16 %v1845
    %v1987 = vunpack.c.l.b16 %v1846
    %v1988 = vunpack.c.h.b16 %v1846
    %v1989 = vunpack.c.l.b16 %v1847
    %v1990 = vunpack.c.h.b16 %v1847
    %v1991 = vunpack.c.l.b16 %v1848
    %v1992 = vunpack.c.h.b16 %v1848
    %v1993 = vunpack.c.l.b16 %v1849
    %v1994 = vunpack.c.h.b16 %v1849
    %v1995 = vunpack.c.l.b16 %v1850
    %v1996 = vunpack.c.h.b16 %v1850
    %v1997 = vunpack.c.l.b16 %v1851
    %v1998 = vunpack.c.h.b16 %v1851
    %v1999 = vunpack.c.l.b16 %v1852
    %v2000 = vunpack.c.h.b16 %v1852
    %v2001 = vunpack.c.l.b16 %v1853
    %v2002 = vunpack.c.h.b16 %v1853
    %v2003 = vunpack.c.l.b16 %v1854
    %v2004 = vunpack.c.h.b16 %v1854
    %v2005 = vunpack.c.l.b16 %v1855
    %v2006 = vunpack.c.h.b16 %v1855
    %v2007 = vunpack.c.l.b16 %v1856
    %v2008 = vunpack.c.h.b16 %v1856
    %v2009 = vunpack.c.l.b16 %v1857
    %v2010 = vunpack.c.h.b16 %v1857
    %v2011 = vunpack.c.l.b16 %v1858
    %v2012 = vunpack.c.h.b16 %v1858
    %v2013 = vunpack.c.l.b16 %v1859
    %v2014 = vunpack.c.h.b16 %v1859
    %v2015 = vunpack.c.l.b16 %v1860
    %v2016 = vunpack.c.h.b16 %v1860
    %v2017 = vunpack.c.l.b16 %v1861
    %v2018 = vunpack.c.h.b16 %v1861
    %v2019 = vunpack.c.l.b16 %v1862
    %v2020 = vunpack.c.h.b16 %v1862
    %v2021 = vunpack.c.l.b16 %v1863
    %v2022 = vunpack.c.h.b16 %v1863
    %v2023 = vunpack.c.l.b16 %v1864
    %v2024 = vunpack.c.h.b16 %v1864
    %v2025 = vunpack.c.l.b16 %v1865
    %v2026 = vunpack.c.h.b16 %v1865
    %v2027 = vunpack.c.l.b16 %v1866
    %v2028 = vunpack.c.h.b16 %v1866
    %v2029 = vunpack.c.l.b16 %v1867
    %v2030 = vunpack.c.h.b16 %v1867
    %v2031 = vunpack.c.l.b16 %v1868
    %v2032 = vunpack.c.h.b16 %v1868
    %v2033 = vunpack.c.l.b16 %v1869
    %v2034 = vunpack.c.h.b16 %v1869
    %v2035 = vunpack.c.l.b16 %v1870
    %v2036 = vunpack.c.h.b16 %v1870
    %v2037 = vunpack.c.l.b16 %v1871
    %v2038 = vunpack.c.h.b16 %v1871
    %v2039 = vunpack.c.l.b16 %v1872
    %v2040 = vunpack.c.h.b16 %v1872
    %v2041 = vunpack.c.l.b16 %v1873
    %v2042 = vunpack.c.h.b16 %v1873
    %v2043 = vunpack.c.l.b16 %v1874
    %v2044 = vunpack.c.h.b16 %v1874
    %v2045 = vunpack.c.l.b16 %v1875
    %v2046 = vunpack.c.h.b16 %v1875
    %v2047 = vunpack.c.l.b16 %v1876
    %v2048 = vunpack.c.h.b16 %v1876
    %v2049 = vunpack.c.l.b16 %v1877
    %v2050 = vunpack.c.h.b16 %v1877
    %v2051 = vunpack.c.l.b16 %v1878
    %v2052 = vunpack.c.h.b16 %v1878
    %v2053 = vunpack.c.l.b16 %v1879
    %v2054 = vunpack.c.h.b16 %v1879
    %v2055 = vunpack.c.l.b16 %v1880
    %v2056 = vunpack.c.h.b16 %v1880
    %v2057 = vunpack.c.l.b16 %v1881
    %v2058 = vunpack.c.h.b16 %v1881
    %v2059 = vunpack.c.l.b16 %v1882
    %v2060 = vunpack.c.h.b16 %v1882
    %v2061 = vunpack.c.l.b16 %v1883
    %v2062 = vunpack.c.h.b16 %v1883
    %v2063 = vunpack.c.l.b16 %v1884
    %v2064 = vunpack.c.h.b16 %v1884
    %v2065 = vunpack.c.l.b16 %v1885
    %v2066 = vunpack.c.h.b16 %v1885
    %v2067 = vunpack.c.l.b16 %v1886
    %v2068 = vunpack.c.h.b16 %v1886
    %v2069 = vunpack.c.l.b16 %v1887
    %v2070 = vunpack.c.h.b16 %v1887
    %v2071 = vunpack.c.l.b16 %v1888
    %v2072 = vunpack.c.h.b16 %v1888
    %v2073 = vunpack.c.l.b16 %v1889
    %v2074 = vunpack.c.h.b16 %v1889
    %v2075 = vunpack.c.l.b16 %v1890
    %v2076 = vunpack.c.h.b16 %v1890
    %v2077 = vunpack.c.l.b16 %v1891
    %v2078 = vunpack.c.h.b16 %v1891
    %v2079 = vunpack.c.l.b16 %v1892
    %v2080 = vunpack.c.h.b16 %v1892
    %v2081 = vunpack.c.l.b16 %v1893
    %v2082 = vunpack.c.h.b16 %v1893
    %v2083 = vunpack.c.l.b16 %v1894
    %v2084 = vunpack.c.h.b16 %v1894
    %v2085 = vunpack.c.l.b16 %v1895
    %v2086 = vunpack.c.h.b16 %v1895
    %v2087 = vunpack.c.l.b16 %v1896
    %v2088 = vunpack.c.h.b16 %v1896
    %v2089 = vunpack.c.l.b16 %v1897
    %v2090 = vunpack.c.h.b16 %v1897
    %v2091 = vunpack.c.l.b16 %v1898
    %v2092 = vunpack.c.h.b16 %v1898
    %v2093 = vunpack.c.l.b16 %v1899
    %v2094 = vunpack.c.h.b16 %v1899
    %v2095 = vunpack.c.l.b16 %v1900
    %v2096 = vunpack.c.h.b16 %v1900
    %v2097 = vunpack.c.l.b16 %v1901
    %v2098 = vunpack.c.h.b16 %v1901
    %v2099 = vunpack.c.l.b16 %v1902
    %v2100 = vunpack.c.h.b16 %v1902
    %v2101 = vunpack.c.l.b16 %v1903
    %v2102 = vunpack.c.h.b16 %v1903
    %v2103 = vunpack.c.l.b16 %v1904
    %v2104 = vunpack.c.h.b16 %v1904
    %v2105 = vunpack.c.l.b16 %v1905
    %v2106 = vunpack.c.h.b16 %v1905
    %v2107 = vunpack.c.l.b16 %v1906
    %v2108 = vunpack.c.h.b16 %v1906
    %v2109 = vunpack.c.l.b16 %v1907
    %v2110 = vunpack.c.h.b16 %v1907
    %v2111 = vunpack.c.l.b16 %v1908
    %v2112 = vunpack.c.h.b16 %v1908
    %v2113 = vpack.c.b16 %v1987, %v1985
    %v2114 = vpack.c.b16 %v1988, %v1986
    %v2115 = vpack.c.b16 %v1991, %v1989
    %v2116 = vpack.c.b16 %v1992, %v1990
    %v2117 = vpack.c.b16 %v1995, %v1993
    %v2118 = vpack.c.b16 %v1996, %v1994
    %v2119 = vpack.c.b16 %v1999, %v1997
    %v2120 = vpack.c.b16 %v2000, %v1998
    %v2121 = vpack.c.b16 %v2003, %v2001
    %v2122 = vpack.c.b16 %v2004, %v2002
    %v2123 = vpack.c.b16 %v2007, %v2005
    %v2124 = vpack.c.b16 %v2008, %v2006
    %v2125 = vpack.c.b16 %v2011, %v2009
    %v2126 = vpack.c.b16 %v2012, %v2010
    %v2127 = vpack.c.b16 %v2015, %v2013
    %v2128 = vpack.c.b16 %v2016, %v2014
    %v2129 = vpack.c.b16 %v2019, %v2017
    %v2130 = vpack.c.b16 %v2020, %v2018
    %v2131 = vpack.c.b16 %v2023, %v2021
    %v2132 = vpack.c.b16 %v2024, %v2022
    %v2133 = vpack.c.b16 %v2027, %v2025
    %v2134 = vpack.c.b16 %v2028, %v2026
    %v2135 = vpack.c.b16 %v2031, %v2029
    %v2136 = vpack.c.b16 %v2032, %v2030
    %v2137 = vpack.c.b16 %v2035, %v2033
    %v2138 = vpack.c.b16 %v2036, %v2034
    %v2139 = vpack.c.b16 %v2039, %v2037
    %v2140 = vpack.c.b16 %v2040, %v2038
    %v2141 = vpack.c.b16 %v2043, %v2041
    %v2142 = vpack.c.b16 %v2044, %v2042
    %v2143 = vpack.c.b16 %v2047, %v2045
    %v2144 = vpack.c.b16 %v2048, %v2046
    %v2145 = vpack.c.b16 %v2051, %v2049
    %v2146 = vpack.c.b16 %v2052, %v2050
    %v2147 = vpack.c.b16 %v2055, %v2053
    %v2148 = vpack.c.b16 %v2056, %v2054
    %v2149 = vpack.c.b16 %v2059, %v2057
    %v2150 = vpack.c.b16 %v2060, %v2058
    %v2151 = vpack.c.b16 %v2063, %v2061
    %v2152 = vpack.c.b16 %v2064, %v2062
    %v2153 = vpack.c.b16 %v2067, %v2065
    %v2154 = vpack.c.b16 %v2068, %v2066
    %v2155 = vpack.c.b16 %v2071, %v2069
    %v2156 = vpack.c.b16 %v2072, %v2070
    %v2157 = vpack.c.b16 %v2075, %v2073
    %v2158 = vpack.c.b16 %v2076, %v2074
    %v2159 = vpack.c.b16 %v2079, %v2077
    %v2160 = vpack.c.b16 %v2080, %v2078
    %v2161 = vpack.c.b16 %v2083, %v2081
    %v2162 = vpack.c.b16 %v2084, %v2082
    %v2163 = vpack.c.b16 %v2087, %v2085
    %v2164 = vpack.c.b16 %v2088, %v2086
    %v2165 = vpack.c.b16 %v2091, %v2089
    %v2166 = vpack.c.b16 %v2092, %v2090
    %v2167 = vpack.c.b16 %v2095, %v2093
    %v2168 = vpack.c.b16 %v2096, %v2094
    %v2169 = vpack.c.b16 %v2099, %v2097
    %v2170 = vpack.c.b16 %v2100, %v2098
    %v2171 = vpack.c.b16 %v2103, %v2101
    %v2172 = vpack.c.b16 %v2104, %v2102
    %v2173 = vpack.c.b16 %v2107, %v2105
    %v2174 = vpack.c.b16 %v2108, %v2106
    %v2175 = vpack.c.b16 %v2111, %v2109
    %v2176 = vpack.c.b16 %v2112, %v2110
    %2241 = vmatprep.subr.bf16.mxu0 %v2128
    %2242 = vmatpush1.bf16.msra.mxu0 %v2127
    %2243 = vmatprep.subr.bf16.mxu0 %v2126
    %2244 = vmatpush1.bf16.msra.mxu0 %v2125
    %2245 = vmatprep.subr.bf16.mxu0 %v2124
    %2246 = vmatpush1.bf16.msra.mxu0 %v2123
    %2247 = vmatprep.subr.bf16.mxu0 %v2122
    %2248 = vmatpush1.bf16.msra.mxu0 %v2121
    %2249 = vmatprep.subr.bf16.mxu0 %v2120
    %2250 = vmatpush1.bf16.msra.mxu0 %v2119
    %2251 = vmatprep.subr.bf16.mxu0 %v2118
    %2252 = vmatpush1.bf16.msra.mxu0 %v2117
    %2253 = vmatprep.subr.bf16.mxu0 %v2116
    %2254 = vmatpush1.bf16.msra.mxu0 %v2115
    %2255 = vmatprep.subr.bf16.mxu0 %v2114
    %2256 = vmatpush1.bf16.msra.mxu0 %v2113
    %2257 = vmatprep.subr.bf16.mxu0 %v2144
    %2258 = vmatpush2.bf16.msra.mxu0 %v2143
    %2259 = vmatprep.subr.bf16.mxu0 %v2142
    %2260 = vmatpush2.bf16.msra.mxu0 %v2141
    %2261 = vmatprep.subr.bf16.mxu0 %v2140
    %2262 = vmatpush2.bf16.msra.mxu0 %v2139
    %2263 = vmatprep.subr.bf16.mxu0 %v2138
    %2264 = vmatpush2.bf16.msra.mxu0 %v2137
    %2265 = vmatprep.subr.bf16.mxu0 %v2136
    %2266 = vmatpush2.bf16.msra.mxu0 %v2135
    %2267 = vmatprep.subr.bf16.mxu0 %v2134
    %2268 = vmatpush2.bf16.msra.mxu0 %v2133
    %2269 = vmatprep.subr.bf16.mxu0 %v2132
    %2270 = vmatpush2.bf16.msra.mxu0 %v2131
    %2271 = vmatprep.subr.bf16.mxu0 %v2130
    %2272 = vmatpush2.bf16.msra.mxu0 %v2129
    %2273 = vmatprep.mubr.bf16.mxu0 %v1840
    %2274 = vmatmul.mubr.bf16.gmra.mxu0 %v1838
    %v2275 = vpop.f32.mrf.mxu0
    %v2276 = vadd.f32 %v1914, %v2275
    %v2277 = vpop.f32.mrf.mxu0
    %v2278 = vadd.f32 %v1918, %v2277
    %v2279 = vpop.f32.mrf.mxu0
    %v2280 = vpop.f32.mrf.mxu0
    %2281 = vdwg.mxu0
    %2282 = vmatprep.subr.bf16.mxu0 %v2160
    %2283 = vmatpush1.bf16.msra.mxu0 %v2159
    %2284 = vmatprep.subr.bf16.mxu0 %v2158
    %2285 = vmatpush1.bf16.msra.mxu0 %v2157
    %2286 = vmatprep.subr.bf16.mxu0 %v2156
    %2287 = vmatpush1.bf16.msra.mxu0 %v2155
    %2288 = vmatprep.subr.bf16.mxu0 %v2154
    %2289 = vmatpush1.bf16.msra.mxu0 %v2153
    %2290 = vmatprep.subr.bf16.mxu0 %v2152
    %2291 = vmatpush1.bf16.msra.mxu0 %v2151
    %2292 = vmatprep.subr.bf16.mxu0 %v2150
    %2293 = vmatpush1.bf16.msra.mxu0 %v2149
    %2294 = vmatprep.subr.bf16.mxu0 %v2148
    %2295 = vmatpush1.bf16.msra.mxu0 %v2147
    %2296 = vmatprep.subr.bf16.mxu0 %v2146
    %2297 = vmatpush1.bf16.msra.mxu0 %v2145
    %2298 = vmatprep.subr.bf16.mxu0 %v2176
    %2299 = vmatpush2.bf16.msra.mxu0 %v2175
    %2300 = vmatprep.subr.bf16.mxu0 %v2174
    %2301 = vmatpush2.bf16.msra.mxu0 %v2173
    %2302 = vmatprep.subr.bf16.mxu0 %v2172
    %2303 = vmatpush2.bf16.msra.mxu0 %v2171
    %2304 = vmatprep.subr.bf16.mxu0 %v2170
    %2305 = vmatpush2.bf16.msra.mxu0 %v2169
    %2306 = vmatprep.subr.bf16.mxu0 %v2168
    %2307 = vmatpush2.bf16.msra.mxu0 %v2167
    %2308 = vmatprep.subr.bf16.mxu0 %v2166
    %2309 = vmatpush2.bf16.msra.mxu0 %v2165
    %2310 = vmatprep.subr.bf16.mxu0 %v2164
    %2311 = vmatpush2.bf16.msra.mxu0 %v2163
    %2312 = vmatprep.subr.bf16.mxu0 %v2162
    %2313 = vmatpush2.bf16.msra.mxu0 %v2161
    %2314 = vmatprep.mubr.bf16.mxu0 %v1844
    %2315 = vmatmul.mubr.bf16.gmra.mxu0 %v1842
    %v2316 = vpop.f32.mrf.mxu0
    %v2317 = vadd.f32 %v2276, %v2316
    %v2318 = vpop.f32.mrf.mxu0
    %v2319 = vadd.f32 %v2278, %v2318
    %v2320 = vpop.f32.mrf.mxu0
    %v2321 = vpop.f32.mrf.mxu0
    %2322 = vdwg.mxu0
    %v2323 = vpack.c.bf16 %v2317, %v2317
    %v2324 = vpack.c.bf16 %v2319, %v2319
    %v2325 = vxor.u32 %v2323, 2147516416
    %v2326 = vxor.u32 %v2324, 2147516416
    %v2328 = vmul.bf16 %v2325, 1069105081
    %v2329 = vpow.bf16.pop %v2328
    %v2331 = vmul.bf16 %v2326, 1069105081
    %v2332 = vpow.bf16.pop %v2331
    %v2333 = vadd.bf16 %v2329, 1065369472
    %v2334 = vadd.bf16 %v2332, 1065369472
    %v2335 = vrcp.bf16.pop %v2333
    %v2336 = vmul.bf16 1065369472, %v2335
    %v2337 = vrcp.bf16.pop %v2334
    %v2338 = vmul.bf16 1065369472, %v2337
    %v2339 = vld [vmem:[%s9] sm:$0xf]
    %v2340 = vld [vmem:[%s9 + $0x4] sm:$0xf]
    %v2341 = vld [vmem:[%s9 + $0x8] sm:$0xf]
    %v2342 = vld [vmem:[%s9 + $0xc] sm:$0xf]
    %v2343 = vld [vmem:[%s9 + $0x10] sm:$0xf]
    %v2344 = vld [vmem:[%s9 + $0x14] sm:$0xf]
    %v2345 = vld [vmem:[%s9 + $0x18] sm:$0xf]
    %v2346 = vld [vmem:[%s9 + $0x1c] sm:$0xf]
    %v2347 = vld [vmem:[%s9 + $0x20] sm:$0xf]
    %v2348 = vld [vmem:[%s9 + $0x24] sm:$0xf]
    %v2349 = vld [vmem:[%s9 + $0x28] sm:$0xf]
    %v2350 = vld [vmem:[%s9 + $0x2c] sm:$0xf]
    %v2351 = vld [vmem:[%s9 + $0x30] sm:$0xf]
    %v2352 = vld [vmem:[%s9 + $0x34] sm:$0xf]
    %v2353 = vld [vmem:[%s9 + $0x38] sm:$0xf]
    %v2354 = vld [vmem:[%s9 + $0x3c] sm:$0xf]
    %v2355 = vld [vmem:[%s9 + $0x40] sm:$0xf]
    %v2356 = vld [vmem:[%s9 + $0x44] sm:$0xf]
    %v2357 = vld [vmem:[%s9 + $0x48] sm:$0xf]
    %v2358 = vld [vmem:[%s9 + $0x4c] sm:$0xf]
    %v2359 = vld [vmem:[%s9 + $0x50] sm:$0xf]
    %v2360 = vld [vmem:[%s9 + $0x54] sm:$0xf]
    %v2361 = vld [vmem:[%s9 + $0x58] sm:$0xf]
    %v2362 = vld [vmem:[%s9 + $0x5c] sm:$0xf]
    %v2363 = vld [vmem:[%s9 + $0x60] sm:$0xf]
    %v2364 = vld [vmem:[%s9 + $0x64] sm:$0xf]
    %v2365 = vld [vmem:[%s9 + $0x68] sm:$0xf]
    %v2366 = vld [vmem:[%s9 + $0x6c] sm:$0xf]
    %v2367 = vld [vmem:[%s9 + $0x70] sm:$0xf]
    %v2368 = vld [vmem:[%s9 + $0x74] sm:$0xf]
    %v2369 = vld [vmem:[%s9 + $0x78] sm:$0xf]
    %v2370 = vld [vmem:[%s9 + $0x7c] sm:$0xf]
    %v2371 = vld [vmem:[%s10] sm:$0x1]
    %v2373 = vlaneseq
    %v2374 = vshrl.u32 %v2373, 7
    %v2375 = vsub.s32 0, %v2374
    %v2376 = vrot.slane %v2371, %v2375
    %v2410 = vunpack.c.l.b16 %v2339
    %v2411 = vunpack.c.l.b16 %v2340
    %v2412 = vunpack.c.l.b16 %v2341
    %v2413 = vunpack.c.l.b16 %v2342
    %v2414 = vunpack.c.l.b16 %v2343
    %v2415 = vunpack.c.l.b16 %v2344
    %v2416 = vunpack.c.l.b16 %v2345
    %v2417 = vunpack.c.l.b16 %v2346
    %v2418 = vunpack.c.l.b16 %v2347
    %v2419 = vunpack.c.l.b16 %v2348
    %v2420 = vunpack.c.l.b16 %v2349
    %v2421 = vunpack.c.l.b16 %v2350
    %v2422 = vunpack.c.l.b16 %v2351
    %v2423 = vunpack.c.l.b16 %v2352
    %v2424 = vunpack.c.l.b16 %v2353
    %v2425 = vunpack.c.l.b16 %v2354
    %v2426 = vunpack.c.l.b16 %v2355
    %v2427 = vunpack.c.l.b16 %v2356
    %v2428 = vunpack.c.l.b16 %v2357
    %v2429 = vunpack.c.l.b16 %v2358
    %v2430 = vunpack.c.l.b16 %v2359
    %v2431 = vunpack.c.l.b16 %v2360
    %v2432 = vunpack.c.l.b16 %v2361
    %v2433 = vunpack.c.l.b16 %v2362
    %v2434 = vunpack.c.l.b16 %v2363
    %v2435 = vunpack.c.l.b16 %v2364
    %v2436 = vunpack.c.l.b16 %v2365
    %v2437 = vunpack.c.l.b16 %v2366
    %v2438 = vunpack.c.l.b16 %v2367
    %v2439 = vunpack.c.l.b16 %v2368
    %v2440 = vunpack.c.l.b16 %v2369
    %v2441 = vunpack.c.l.b16 %v2370
    %v2442 = vpack.c.b16 %v2411, %v2410
    %v2443 = vpack.c.b16 %v2413, %v2412
    %v2444 = vpack.c.b16 %v2415, %v2414
    %v2445 = vpack.c.b16 %v2417, %v2416
    %v2446 = vpack.c.b16 %v2419, %v2418
    %v2447 = vpack.c.b16 %v2421, %v2420
    %v2448 = vpack.c.b16 %v2423, %v2422
    %v2449 = vpack.c.b16 %v2425, %v2424
    %v2450 = vpack.c.b16 %v2427, %v2426
    %v2451 = vpack.c.b16 %v2429, %v2428
    %v2452 = vpack.c.b16 %v2431, %v2430
    %v2453 = vpack.c.b16 %v2433, %v2432
    %v2454 = vpack.c.b16 %v2435, %v2434
    %v2455 = vpack.c.b16 %v2437, %v2436
    %v2456 = vpack.c.b16 %v2439, %v2438
    %v2457 = vpack.c.b16 %v2441, %v2440
    %2474 = vmatprep.subr.bf16.mxu0 0
    %2475 = vmatpush1.bf16.msra.mxu0 %v2449
    %2476 = vmatprep.subr.bf16.mxu0 0
    %2477 = vmatpush1.bf16.msra.mxu0 %v2448
    %2478 = vmatprep.subr.bf16.mxu0 0
    %2479 = vmatpush1.bf16.msra.mxu0 %v2447
    %2480 = vmatprep.subr.bf16.mxu0 0
    %2481 = vmatpush1.bf16.msra.mxu0 %v2446
    %2482 = vmatprep.subr.bf16.mxu0 0
    %2483 = vmatpush1.bf16.msra.mxu0 %v2445
    %2484 = vmatprep.subr.bf16.mxu0 0
    %2485 = vmatpush1.bf16.msra.mxu0 %v2444
    %2486 = vmatprep.subr.bf16.mxu0 0
    %2487 = vmatpush1.bf16.msra.mxu0 %v2443
    %2488 = vmatprep.subr.bf16.mxu0 0
    %2489 = vmatpush1.bf16.msra.mxu0 %v2442
    %2490 = vmatprep.subr.bf16.mxu0 0
    %2491 = vmatpush2.bf16.msra.mxu0 %v2457
    %2492 = vmatprep.subr.bf16.mxu0 0
    %2493 = vmatpush2.bf16.msra.mxu0 %v2456
    %2494 = vmatprep.subr.bf16.mxu0 0
    %2495 = vmatpush2.bf16.msra.mxu0 %v2455
    %2496 = vmatprep.subr.bf16.mxu0 0
    %2497 = vmatpush2.bf16.msra.mxu0 %v2454
    %2498 = vmatprep.subr.bf16.mxu0 0
    %2499 = vmatpush2.bf16.msra.mxu0 %v2453
    %2500 = vmatprep.subr.bf16.mxu0 0
    %2501 = vmatpush2.bf16.msra.mxu0 %v2452
    %2502 = vmatprep.subr.bf16.mxu0 0
    %2503 = vmatpush2.bf16.msra.mxu0 %v2451
    %2504 = vmatprep.subr.bf16.mxu0 0
    %2505 = vmatpush2.bf16.msra.mxu0 %v2450
    %2506 = vmatprep.mubr.bf16.mxu0 %v2338
    %2507 = vmatmul.mubr.bf16.gmra.mxu0 %v2336
    %v2508 = vpop.f32.mrf.mxu0
    %v2509 = vadd.f32 %v2376, %v2508
    %v2510 = vpop.f32.mrf.mxu0
    %v2511 = vpop.f32.mrf.mxu0
    %v2512 = vpop.f32.mrf.mxu0
    %2513 = vdwg.mxu0
    %v2514 = vpack.c.bf16 %v2509, %v2509
    %v2515 = vxor.u32 %v2514, 2147516416
    %v2517 = vmul.bf16 %v2515, 1069105081
    %v2518 = vpow.bf16.pop %v2517
    %v2519 = vadd.bf16 %v2518, 1065369472
    %v2520 = vrcp.bf16.pop %v2519
    %v2521 = vmul.bf16 1065369472, %v2520
    %v2522 = vld [vmem:[%s11] sm:$0xf]
    %v2523 = vld [vmem:[%s11 + $0x4] sm:$0xf]
    %v2524 = vld [vmem:[%s11 + $0x8] sm:$0xf]
    %v2525 = vld [vmem:[%s11 + $0xc] sm:$0xf]
    %v2526 = vld [vmem:[%s11 + $0x10] sm:$0xf]
    %v2527 = vld [vmem:[%s11 + $0x14] sm:$0xf]
    %v2528 = vld [vmem:[%s11 + $0x18] sm:$0xf]
    %v2529 = vld [vmem:[%s11 + $0x1c] sm:$0xf]
    %v2530 = vld [vmem:[%s11 + $0x20] sm:$0xf]
    %v2531 = vld [vmem:[%s11 + $0x24] sm:$0xf]
    %v2532 = vld [vmem:[%s11 + $0x28] sm:$0xf]
    %v2533 = vld [vmem:[%s11 + $0x2c] sm:$0xf]
    %v2534 = vld [vmem:[%s11 + $0x30] sm:$0xf]
    %v2535 = vld [vmem:[%s11 + $0x34] sm:$0xf]
    %v2536 = vld [vmem:[%s11 + $0x38] sm:$0xf]
    %v2537 = vld [vmem:[%s11 + $0x3c] sm:$0xf]
    %v2538 = vld [vmem:[%s12] sm:$0x1]
    %v2540 = vlaneseq
    %v2541 = vshrl.u32 %v2540, 7
    %v2542 = vsub.s32 0, %v2541
    %v2543 = vrot.slane %v2538, %v2542
    %v2561 = vunpack.c.l.b16 %v2522
    %v2562 = vunpack.c.l.b16 %v2523
    %v2563 = vunpack.c.l.b16 %v2524
    %v2564 = vunpack.c.l.b16 %v2525
    %v2565 = vunpack.c.l.b16 %v2526
    %v2566 = vunpack.c.l.b16 %v2527
    %v2567 = vunpack.c.l.b16 %v2528
    %v2568 = vunpack.c.l.b16 %v2529
    %v2569 = vunpack.c.l.b16 %v2530
    %v2570 = vunpack.c.l.b16 %v2531
    %v2571 = vunpack.c.l.b16 %v2532
    %v2572 = vunpack.c.l.b16 %v2533
    %v2573 = vunpack.c.l.b16 %v2534
    %v2574 = vunpack.c.l.b16 %v2535
    %v2575 = vunpack.c.l.b16 %v2536
    %v2576 = vunpack.c.l.b16 %v2537
    %v2577 = vpack.c.b16 %v2562, %v2561
    %v2578 = vpack.c.b16 %v2564, %v2563
    %v2579 = vpack.c.b16 %v2566, %v2565
    %v2580 = vpack.c.b16 %v2568, %v2567
    %v2581 = vpack.c.b16 %v2570, %v2569
    %v2582 = vpack.c.b16 %v2572, %v2571
    %v2583 = vpack.c.b16 %v2574, %v2573
    %v2584 = vpack.c.b16 %v2576, %v2575
    %2593 = vmatprep.subr.bf16.mxu0 0
    %2594 = vmatpush1.bf16.msra.mxu0 %v2584
    %2595 = vmatprep.subr.bf16.mxu0 0
    %2596 = vmatpush1.bf16.msra.mxu0 %v2583
    %2597 = vmatprep.subr.bf16.mxu0 0
    %2598 = vmatpush1.bf16.msra.mxu0 %v2582
    %2599 = vmatprep.subr.bf16.mxu0 0
    %2600 = vmatpush1.bf16.msra.mxu0 %v2581
    %2601 = vmatprep.subr.bf16.mxu0 0
    %2602 = vmatpush1.bf16.msra.mxu0 %v2580
    %2603 = vmatprep.subr.bf16.mxu0 0
    %2604 = vmatpush1.bf16.msra.mxu0 %v2579
    %2605 = vmatprep.subr.bf16.mxu0 0
    %2606 = vmatpush1.bf16.msra.mxu0 %v2578
    %2607 = vmatprep.subr.bf16.mxu0 0
    %2608 = vmatpush1.bf16.msra.mxu0 %v2577
    %2609 = vmatprep.subr.bf16.mxu0 0
    %2610 = vmatpush2.bf16.msra.mxu0 0
    %2611 = vmatprep.subr.bf16.mxu0 0
    %2612 = vmatpush2.bf16.msra.mxu0 0
    %2613 = vmatprep.subr.bf16.mxu0 0
    %2614 = vmatpush2.bf16.msra.mxu0 0
    %2615 = vmatprep.subr.bf16.mxu0 0
    %2616 = vmatpush2.bf16.msra.mxu0 0
    %2617 = vmatprep.subr.bf16.mxu0 0
    %2618 = vmatpush2.bf16.msra.mxu0 0
    %2619 = vmatprep.subr.bf16.mxu0 0
    %2620 = vmatpush2.bf16.msra.mxu0 0
    %2621 = vmatprep.subr.bf16.mxu0 0
    %2622 = vmatpush2.bf16.msra.mxu0 0
    %2623 = vmatprep.subr.bf16.mxu0 0
    %2624 = vmatpush2.bf16.msra.mxu0 0
    %2625 = vmatprep.mubr.bf16.mxu0 0
    %2626 = vmatmul.mubr.bf16.gmra.mxu0 %v2521
    %v2627 = vpop.f32.mrf.mxu0
    %v2628 = vadd.f32 %v2543, %v2627
    %v2629 = vpop.f32.mrf.mxu0
    %v2630 = vpop.f32.mrf.mxu0
    %v2631 = vpop.f32.mrf.mxu0
    %2632 = vdwg.mxu0
    %v2633 = vpack.c.bf16 %v2628, %v2628
    %v2634 = vxor.u32 %v2633, 2147516416
    %v2636 = vmul.bf16 %v2634, 1069105081
    %v2637 = vpow.bf16.pop %v2636
    %v2638 = vadd.bf16 %v2637, 1065369472
    %v2639 = vrcp.bf16.pop %v2638
    %v2640 = vmul.bf16 1065369472, %v2639
    %v2641 = vld [vmem:[%s13] sm:$0xf]
    %v2642 = vld [vmem:[%s13 + $0x4] sm:$0xf]
    %v2643 = vld [vmem:[%s13 + $0x8] sm:$0xf]
    %v2644 = vld [vmem:[%s13 + $0xc] sm:$0xf]
    %v2645 = vld [vmem:[%s14] sm:$0x1]
    %v2647 = vlaneseq
    %v2648 = vshrl.u32 %v2647, 7
    %v2649 = vsub.s32 0, %v2648
    %v2650 = vrot.slane %v2645, %v2649
    %v2656 = vunpack.c.l.b16 %v2641
    %v2657 = vunpack.c.l.b16 %v2642
    %v2658 = vunpack.c.l.b16 %v2643
    %v2659 = vunpack.c.l.b16 %v2644
    %v2660 = vpack.c.b16 %v2657, %v2656
    %v2661 = vpack.c.b16 %v2659, %v2658
    %vm2664 = vcmask 261120
    %v2666 = vsel %vm2664, %v2640, 0
    %2668 = vmatprep.subr.bf16.mxu0 0
    %2669 = vmatpush1.bf16.msra.mxu0 0
    %2670 = vmatprep.subr.bf16.mxu0 0
    %2671 = vmatpush1.bf16.msra.mxu0 0
    %2672 = vmatprep.subr.bf16.mxu0 0
    %2673 = vmatpush1.bf16.msra.mxu0 0
    %2674 = vmatprep.subr.bf16.mxu0 0
    %2675 = vmatpush1.bf16.msra.mxu0 0
    %2676 = vmatprep.subr.bf16.mxu0 0
    %2677 = vmatpush1.bf16.msra.mxu0 0
    %2678 = vmatprep.subr.bf16.mxu0 0
    %2679 = vmatpush1.bf16.msra.mxu0 0
    %2680 = vmatprep.subr.bf16.mxu0 0
    %2681 = vmatpush1.bf16.msra.mxu0 %v2661
    %2682 = vmatprep.subr.bf16.mxu0 0
    %2683 = vmatpush1.bf16.msra.mxu0 %v2660
    %2684 = vmatprep.subr.bf16.mxu0 0
    %2685 = vmatpush2.bf16.msra.mxu0 0
    %2686 = vmatprep.subr.bf16.mxu0 0
    %2687 = vmatpush2.bf16.msra.mxu0 0
    %2688 = vmatprep.subr.bf16.mxu0 0
    %2689 = vmatpush2.bf16.msra.mxu0 0
    %2690 = vmatprep.subr.bf16.mxu0 0
    %2691 = vmatpush2.bf16.msra.mxu0 0
    %2692 = vmatprep.subr.bf16.mxu0 0
    %2693 = vmatpush2.bf16.msra.mxu0 0
    %2694 = vmatprep.subr.bf16.mxu0 0
    %2695 = vmatpush2.bf16.msra.mxu0 0
    %2696 = vmatprep.subr.bf16.mxu0 0
    %2697 = vmatpush2.bf16.msra.mxu0 0
    %2698 = vmatprep.subr.bf16.mxu0 0
    %2699 = vmatpush2.bf16.msra.mxu0 0
    %2700 = vmatprep.mubr.bf16.mxu0 0
    %2701 = vmatmul.mubr.bf16.gmra.mxu0 %v2666
    %v2702 = vpop.f32.mrf.mxu0
    %v2703 = vadd.f32 %v2650, %v2702
    %v2704 = vpop.f32.mrf.mxu0
    %v2705 = vpop.f32.mrf.mxu0
    %v2706 = vpop.f32.mrf.mxu0
    %2707 = vdwg.mxu0
    %2708 = vst [vmem:[%s15] sm:$0xff] %v2703
    // Predicated region
    $region82: #{mlp_forward.1} parent=1 // pred_check
      _
    $region83: #{mlp_forward.1} parent=1 // pred_check_branch
      %2710 = sbr.rel (0) target = $region85
    $region84: #{mlp_forward.1} parent=1 // pred_region
      _
    $region85: #{mlp_forward.1} parent=1 // pred_fallthru
      _
    // Predicated region
    $region86: #{mlp_forward.1} parent=1 // pred_check
      _
    $region87: #{mlp_forward.1} parent=1 // pred_check_branch
      %2712 = sbr.rel (0) target = $region89
    $region88: #{mlp_forward.1} parent=1 // pred_region
      _
    $region89: #{mlp_forward.1} parent=1 // pred_fallthru
      _
    %2713 = vsyncpa [#allocation3], 1
    %2714 = vsyncpa [#allocation5], 1
    %2715 = vsyncpa [#allocation8], 1

</llo_original>
